<compile_context>
chip_gen: v6e
topology: v6e:2x2x1
jax: 0.10.0
libtpu: 0.0.40
codegen_flags: <defaults>
</compile_context>

<pallas_src>
import math

import jax
import jax.numpy as jnp
from jax.experimental import pallas as pl
from jax.experimental.pallas import tpu as pltpu


def _round_up(x, m):
    return (x + m - 1) // m * m


# ---------------------------------------------------------------------------
# Fused kernel: per dst tile, loop (relation, src tile)
#   accs : [tm, F_in]  raw (unnormalized) message sum for the current relation
#   acco : [tm, Fp]    sum_r (S_r @ W_r), finalized with deg_inv / skip / bias / ReLU
# ---------------------------------------------------------------------------
def _rgcn_kernel(adj_ref, xsrc_ref, wrel_ref, xdst_ref, wskip_ref,
                 deginv_ref, b_ref, o_ref, accs_ref, acco_ref):
    r = pl.program_id(1)
    k = pl.program_id(2)
    nr = pl.num_programs(1)
    nk = pl.num_programs(2)

    @pl.when(jnp.logical_and(r == 0, k == 0))
    def _():
        acco_ref[...] = jnp.zeros_like(acco_ref)

    @pl.when(k == 0)
    def _():
        accs_ref[...] = jnp.zeros_like(accs_ref)

    # raw message sum: A_r[dst_tile, src_tile] @ X[src_tile]
    accs_ref[...] += jnp.dot(adj_ref[...], xsrc_ref[...],
                             preferred_element_type=jnp.float32)

    @pl.when(k == nk - 1)
    def _():
        # per-relation projection folded into the output accumulator
        acco_ref[...] += jnp.dot(accs_ref[...], wrel_ref[...],
                                 preferred_element_type=jnp.float32)

    @pl.when(jnp.logical_and(r == nr - 1, k == nk - 1))
    def _():
        # mean normalization (deg_inv hoisted out of the relation loop),
        # skip connection (NOT scaled by deg_inv), bias, ReLU.
        skip = jnp.dot(xdst_ref[...], wskip_ref[...],
                       preferred_element_type=jnp.float32)
        out = acco_ref[...] * deginv_ref[...] + skip + b_ref[...]
        o_ref[...] = jnp.maximum(out, 0.0).astype(o_ref.dtype)


def rel_graph_conv(x, adj, deg_inv, rel_w, skip_w, skip_b, *, tm=256, tk=256):
    """x:[N,F_in], adj:[R,N,N] (adj[r,dst,src]=edge weight, 0=no edge),
    deg_inv:[N,1] (1/in-degree, 0 for isolated), rel_w:[R,F_in,F_out],
    skip_w:[F_in,F_out], skip_b:[F_out] -> [N,F_out]."""
    N, F_in = x.shape
    R = adj.shape[0]
    F_out = rel_w.shape[-1]
    f32 = jnp.float32

    # Lane-dense output padding; node padding so dst/src tiles divide evenly.
    Fp = _round_up(F_out, 128)
    n128 = _round_up(N, 128)
    tm = min(tm, n128)
    tk = min(tk, n128)
    Np = _round_up(N, math.lcm(tm, tk))

    if Np == N:
        x_p = x.astype(f32)
        adj_p = adj.astype(f32)
        deg_p = deg_inv.reshape(N, 1).astype(f32)
    else:
        x_p = jnp.zeros((Np, F_in), f32).at[:N].set(x.astype(f32))
        adj_p = jnp.zeros((R, Np, Np), f32).at[:, :N, :N].set(adj.astype(f32))
        deg_p = jnp.zeros((Np, 1), f32).at[:N].set(deg_inv.reshape(N, 1).astype(f32))

    w_rel_p = jnp.zeros((R, F_in, Fp), f32).at[..., :F_out].set(rel_w.astype(f32))
    w_skip_p = jnp.zeros((F_in, Fp), f32).at[:, :F_out].set(skip_w.astype(f32))
    b_p = jnp.zeros((1, Fp), f32).at[0, :F_out].set(skip_b.astype(f32))

    n_dst = Np // tm
    n_src = Np // tk

    out_p = pl.pallas_call(
        _rgcn_kernel,
        out_shape=jax.ShapeDtypeStruct((Np, Fp), x.dtype),
        grid_spec=pltpu.PrefetchScalarGridSpec(
            num_scalar_prefetch=0,
            grid=(n_dst, R, n_src),
            in_specs=[
                # A[r, dst_tile, src_tile]; relation dim squeezed -> 2-D ref
                pl.BlockSpec((pl.Squeezed(), tm, tk),
                             lambda i, r, k: (r, i, k)),
                # X at the src tile (streamed over k)
                pl.BlockSpec((tk, F_in), lambda i, r, k: (k, 0)),
                # W_r (resident for the whole relation's k loop)
                pl.BlockSpec((pl.Squeezed(), F_in, Fp),
                             lambda i, r, k: (r, 0, 0)),
                # X at the dst tile (for the skip connection; resident per dst tile)
                pl.BlockSpec((tm, F_in), lambda i, r, k: (i, 0)),
                # W_skip, 1/in-degree, skip bias (resident)
                pl.BlockSpec((F_in, Fp), lambda i, r, k: (0, 0)),
                pl.BlockSpec((tm, 1), lambda i, r, k: (i, 0)),
                pl.BlockSpec((1, Fp), lambda i, r, k: (0, 0)),
            ],
            out_specs=pl.BlockSpec((tm, Fp), lambda i, r, k: (i, 0)),
            scratch_shapes=[
                pltpu.VMEM((tm, F_in), jnp.float32),   # per-relation message sum
                pltpu.VMEM((tm, Fp), jnp.float32),     # output accumulator
            ],
        ),
        compiler_params=pltpu.CompilerParams(
            # dst tiles are independent (megacore-parallel on v7x);
            # relation / src-tile axes accumulate into the same output block.
            dimension_semantics=("parallel", "arbitrary", "arbitrary")),
    )(adj_p, x_p, w_rel_p, x_p, w_skip_p, deg_p, b_p)

    return out_p[:N, :F_out]


if __name__ == "__main__":
    key = jax.random.PRNGKey(0)
    N, F_in, F_out, R = 64, 32, 32, 4
    k1, k2, k3, k4, k5, k6 = jax.random.split(key, 6)

    # node features
    x = jax.random.normal(k1, (N, F_in), jnp.float32)

    # random graph: same connectivity for every relation (ogbn-proteins style),
    # per-relation prior edge weights
    mask = (jax.random.uniform(k2, (N, N)) < 0.25).astype(jnp.float32)  # [dst, src]
    ew = jax.random.uniform(k3, (R, N, N), dtype=jnp.float32)
    adj = mask[None] * ew  # A[r, dst, src]

    deg = mask.sum(axis=1, keepdims=True)                  # in-degree of each dst
    deg_inv = jnp.where(deg > 0, 1.0 / deg, 0.0).astype(jnp.float32)

    # deterministic parameter init (kaiming-style uniform ranges)
    bound = 1.0 / jnp.sqrt(jnp.float32(F_in))
    rel_w = jax.random.uniform(k4, (R, F_in, F_out), jnp.float32, -bound, bound)
    skip_w = jax.random.uniform(k5, (F_in, F_out), jnp.float32, -bound, bound)
    skip_b = jax.random.uniform(k6, (F_out,), jnp.float32, -bound, bound)

    out = rel_graph_conv(x, adj, deg_inv, rel_w, skip_w, skip_b)
    jax.block_until_ready(out)

    # pure-JAX reference (original op order)
    ref = jnp.einsum('rds,sf->rdf', adj, x) * deg_inv[None]
    ref = jnp.einsum('rdf,rfo->do', ref, rel_w) + x @ skip_w + skip_b
    ref = jnp.maximum(ref, 0.0)

    assert out.shape == ref.shape
    assert jnp.allclose(out, ref, atol=1e-4, rtol=1e-4), "mismatch vs reference"

    print("KERNEL_OK")
</pallas_src>

<mosaic_0001>
module attributes {stable_mosaic.version = 11 : i64} {
  func.func @_rgcn_kernel(%arg0: i32, %arg1: i32, %arg2: i32, %arg3: memref<1x128x128xf32, #tpu.memory_space<vmem>>, %arg4: memref<128x32xf32, #tpu.memory_space<vmem>>, %arg5: memref<1x32x128xf32, #tpu.memory_space<vmem>>, %arg6: memref<128x32xf32, #tpu.memory_space<vmem>>, %arg7: memref<32x128xf32, #tpu.memory_space<vmem>>, %arg8: memref<128x1xf32, #tpu.memory_space<vmem>>, %arg9: memref<1x128xf32, #tpu.memory_space<vmem>>, %arg10: memref<128x128xf32, #tpu.memory_space<vmem>>, %arg11: memref<128x32xf32, #tpu.memory_space<vmem>>, %arg12: memref<128x128xf32, #tpu.memory_space<vmem>>) attributes {dimension_semantics = [#tpu.dimension_semantics<parallel>, #tpu.dimension_semantics<arbitrary>, #tpu.dimension_semantics<arbitrary>], iteration_bounds = array<i64: 1, 4, 1>, scalar_prefetch = 0 : i64, scratch_operands = 2 : i64, tpu.core_type = #tpu.core_type<tc>, window_params = [{transform_indices = @transform_0, window_bounds = array<i64: 1, 128, 128>}, {transform_indices = @transform_1, window_bounds = array<i64: 128, 32>}, {transform_indices = @transform_2, window_bounds = array<i64: 1, 32, 128>}, {transform_indices = @transform_3, window_bounds = array<i64: 128, 32>}, {pipeline_mode = #tpu.pipeline_mode<synchronous>, transform_indices = @transform_4, window_bounds = array<i64: 32, 128>}, {transform_indices = @transform_5, window_bounds = array<i64: 128, 1>}, {pipeline_mode = #tpu.pipeline_mode<synchronous>, transform_indices = @transform_6, window_bounds = array<i64: 1, 128>}, {transform_indices = @transform_7, window_bounds = array<i64: 128, 128>}]} {
    %c0_i32 = arith.constant 0 : i32
    %0 = arith.cmpi eq, %arg1, %c0_i32 : i32
    %c0_i32_0 = arith.constant 0 : i32
    %1 = arith.cmpi eq, %arg2, %c0_i32_0 : i32
    %2 = arith.andi %0, %1 : i1
    %3 = arith.extui %2 : i1 to i32
    %c0_i32_1 = arith.constant 0 : i32
    %4 = arith.cmpi ne, %3, %c0_i32_1 : i32
    scf.if %4 {
      %cst_16 = arith.constant 0.000000e+00 : f32
      %23 = vector.broadcast %cst_16 : f32 to vector<128x128xf32>
      %c0_17 = arith.constant 0 : index
      %c0_18 = arith.constant 0 : index
      %24 = vector.load %arg12[%c0_17, %c0_18] : memref<128x128xf32, #tpu.memory_space<vmem>>, vector<128x128xf32>
      tpu.vector_store %arg12[%c0_17, %c0_18], %23 {strides = array<i32>} : memref<128x128xf32, #tpu.memory_space<vmem>>, vector<128x128xf32>,
    } else {
    }
    %c0_i32_2 = arith.constant 0 : i32
    %5 = arith.cmpi eq, %arg2, %c0_i32_2 : i32
    %6 = arith.extui %5 : i1 to i32
    %c0_i32_3 = arith.constant 0 : i32
    %7 = arith.cmpi ne, %6, %c0_i32_3 : i32
    scf.if %7 {
      %cst_16 = arith.constant 0.000000e+00 : f32
      %23 = vector.broadcast %cst_16 : f32 to vector<128x32xf32>
      %c0_17 = arith.constant 0 : index
      %c0_18 = arith.constant 0 : index
      %24 = vector.load %arg11[%c0_17, %c0_18] : memref<128x32xf32, #tpu.memory_space<vmem>>, vector<128x32xf32>
      tpu.vector_store %arg11[%c0_17, %c0_18], %23 {strides = array<i32>} : memref<128x32xf32, #tpu.memory_space<vmem>>, vector<128x32xf32>,
    } else {
    }
    %c0 = arith.constant 0 : index
    %c0_4 = arith.constant 0 : index
    %8 = vector.load %arg11[%c0, %c0_4] : memref<128x32xf32, #tpu.memory_space<vmem>>, vector<128x32xf32>
    %c0_5 = arith.constant 0 : index
    %c0_6 = arith.constant 0 : index
    %c0_7 = arith.constant 0 : index
    %9 = vector.load %arg3[%c0_5, %c0_6, %c0_7] : memref<1x128x128xf32, #tpu.memory_space<vmem>>, vector<1x128x128xf32>
    %10 = vector.shape_cast %9 : vector<1x128x128xf32> to vector<128x128xf32>
    %c0_8 = arith.constant 0 : index
    %c0_9 = arith.constant 0 : index
    %11 = vector.load %arg4[%c0_8, %c0_9] : memref<128x32xf32, #tpu.memory_space<vmem>>, vector<128x32xf32>
    %cst = arith.constant dense<0.000000e+00> : vector<128x32xf32>
    %12 = tpu.matmul %10, %11, %cst {dimension_numbers = #tpu.dot_dimension_numbers<[1], [0], [0], [1], [0, 0, 1, 1], [], []>} : vector<128x128xf32>, vector<128x32xf32>, vector<128x32xf32> -> vector<128x32xf32>
    %13 = arith.addf %8, %12 : vector<128x32xf32>
    %c0_10 = arith.constant 0 : index
    %c0_11 = arith.constant 0 : index
    %14 = vector.load %arg11[%c0_10, %c0_11] : memref<128x32xf32, #tpu.memory_space<vmem>>, vector<128x32xf32>
    tpu.vector_store %arg11[%c0_10, %c0_11], %13 {strides = array<i32>} : memref<128x32xf32, #tpu.memory_space<vmem>>, vector<128x32xf32>,
    %c0_i32_12 = arith.constant 0 : i32
    %15 = arith.cmpi eq, %arg2, %c0_i32_12 : i32
    %16 = arith.extui %15 : i1 to i32
    %c0_i32_13 = arith.constant 0 : i32
    %17 = arith.cmpi ne, %16, %c0_i32_13 : i32
    scf.if %17 {
      %c0_16 = arith.constant 0 : index
      %c0_17 = arith.constant 0 : index
      %23 = vector.load %arg12[%c0_16, %c0_17] : memref<128x128xf32, #tpu.memory_space<vmem>>, vector<128x128xf32>
      %c0_18 = arith.constant 0 : index
      %c0_19 = arith.constant 0 : index
      %24 = vector.load %arg11[%c0_18, %c0_19] : memref<128x32xf32, #tpu.memory_space<vmem>>, vector<128x32xf32>
      %c0_20 = arith.constant 0 : index
      %c0_21 = arith.constant 0 : index
      %c0_22 = arith.constant 0 : index
      %25 = vector.load %arg5[%c0_20, %c0_21, %c0_22] : memref<1x32x128xf32, #tpu.memory_space<vmem>>, vector<1x32x128xf32>
      %26 = vector.shape_cast %25 : vector<1x32x128xf32> to vector<32x128xf32>
      %cst_23 = arith.constant dense<0.000000e+00> : vector<128x128xf32>
      %27 = tpu.matmul %24, %26, %cst_23 {dimension_numbers = #tpu.dot_dimension_numbers<[1], [0], [0], [1], [0, 0, 1, 1], [], []>} : vector<128x32xf32>, vector<32x128xf32>, vector<128x128xf32> -> vector<128x128xf32>
      %28 = arith.addf %23, %27 : vector<128x128xf32>
      %c0_24 = arith.constant 0 : index
      %c0_25 = arith.constant 0 : index
      %29 = vector.load %arg12[%c0_24, %c0_25] : memref<128x128xf32, #tpu.memory_space<vmem>>, vector<128x128xf32>
      tpu.vector_store %arg12[%c0_24, %c0_25], %28 {strides = array<i32>} : memref<128x128xf32, #tpu.memory_space<vmem>>, vector<128x128xf32>,
    } else {
    }
    %c3_i32 = arith.constant 3 : i32
    %18 = arith.cmpi eq, %arg1, %c3_i32 : i32
    %c0_i32_14 = arith.constant 0 : i32
    %19 = arith.cmpi eq, %arg2, %c0_i32_14 : i32
    %20 = arith.andi %18, %19 : i1
    %21 = arith.extui %20 : i1 to i32
    %c0_i32_15 = arith.constant 0 : i32
    %22 = arith.cmpi ne, %21, %c0_i32_15 : i32
    scf.if %22 {
      %c0_16 = arith.constant 0 : index
      %c0_17 = arith.constant 0 : index
      %23 = vector.load %arg6[%c0_16, %c0_17] : memref<128x32xf32, #tpu.memory_space<vmem>>, vector<128x32xf32>
      %c0_18 = arith.constant 0 : index
      %c0_19 = arith.constant 0 : index
      %24 = vector.load %arg7[%c0_18, %c0_19] : memref<32x128xf32, #tpu.memory_space<vmem>>, vector<32x128xf32>
      %cst_20 = arith.constant dense<0.000000e+00> : vector<128x128xf32>
      %25 = tpu.matmul %23, %24, %cst_20 {dimension_numbers = #tpu.dot_dimension_numbers<[1], [0], [0], [1], [0, 0, 1, 1], [], []>} : vector<128x32xf32>, vector<32x128xf32>, vector<128x128xf32> -> vector<128x128xf32>
      %c0_21 = arith.constant 0 : index
      %c0_22 = arith.constant 0 : index
      %26 = vector.load %arg12[%c0_21, %c0_22] : memref<128x128xf32, #tpu.memory_space<vmem>>, vector<128x128xf32>
      %c0_23 = arith.constant 0 : index
      %c0_24 = arith.constant 0 : index
      %27 = vector.load %arg8[%c0_23, %c0_24] : memref<128x1xf32, #tpu.memory_space<vmem>>, vector<128x1xf32>
      %28 = vector.broadcast %27 : vector<128x1xf32> to vector<128x128xf32>
      %29 = arith.mulf %26, %28 : vector<128x128xf32>
      %30 = arith.addf %29, %25 : vector<128x128xf32>
      %c0_25 = arith.constant 0 : index
      %c0_26 = arith.constant 0 : index
      %31 = vector.load %arg9[%c0_25, %c0_26] : memref<1x128xf32, #tpu.memory_space<vmem>>, vector<1x128xf32>
      %32 = vector.broadcast %31 : vector<1x128xf32> to vector<128x128xf32>
      %33 = arith.addf %30, %32 : vector<128x128xf32>
      %cst_27 = arith.constant 0.000000e+00 : f32
      %34 = vector.broadcast %cst_27 : f32 to vector<128x128xf32>
      %35 = arith.maximumf %33, %34 : vector<128x128xf32>
      %c0_28 = arith.constant 0 : index
      %c0_29 = arith.constant 0 : index
      %36 = vector.load %arg10[%c0_28, %c0_29] : memref<128x128xf32, #tpu.memory_space<vmem>>, vector<128x128xf32>
      tpu.vector_store %arg10[%c0_28, %c0_29], %35 {strides = array<i32>} : memref<128x128xf32, #tpu.memory_space<vmem>>, vector<128x128xf32>,
    } else {
    }
    return
  }
  func.func @transform_0(%arg0: i32, %arg1: i32, %arg2: i32) -> (i32, i32, i32) {
    %c0_i32 = arith.constant 0 : i32
    return %arg1, %arg0, %arg2 : i32, i32, i32
  }
  func.func @transform_1(%arg0: i32, %arg1: i32, %arg2: i32) -> (i32, i32) {
    %c0_i32 = arith.constant 0 : i32
    %c0_i32_0 = arith.constant 0 : i32
    return %arg2, %c0_i32 : i32, i32
  }
  func.func @transform_2(%arg0: i32, %arg1: i32, %arg2: i32) -> (i32, i32, i32) {
    %c0_i32 = arith.constant 0 : i32
    %c0_i32_0 = arith.constant 0 : i32
    %c0_i32_1 = arith.constant 0 : i32
    return %arg1, %c0_i32, %c0_i32_0 : i32, i32, i32
  }
  func.func @transform_3(%arg0: i32, %arg1: i32, %arg2: i32) -> (i32, i32) {
    %c0_i32 = arith.constant 0 : i32
    %c0_i32_0 = arith.constant 0 : i32
    return %arg0, %c0_i32 : i32, i32
  }
  func.func @transform_4(%arg0: i32, %arg1: i32, %arg2: i32) -> (i32, i32) {
    %c0_i32 = arith.constant 0 : i32
    %c0_i32_0 = arith.constant 0 : i32
    %c0_i32_1 = arith.constant 0 : i32
    return %c0_i32, %c0_i32_0 : i32, i32
  }
  func.func @transform_5(%arg0: i32, %arg1: i32, %arg2: i32) -> (i32, i32) {
    %c0_i32 = arith.constant 0 : i32
    %c0_i32_0 = arith.constant 0 : i32
    return %arg0, %c0_i32 : i32, i32
  }
  func.func @transform_6(%arg0: i32, %arg1: i32, %arg2: i32) -> (i32, i32) {
    %c0_i32 = arith.constant 0 : i32
    %c0_i32_0 = arith.constant 0 : i32
    %c0_i32_1 = arith.constant 0 : i32
    return %c0_i32, %c0_i32_0 : i32, i32
  }
  func.func @transform_7(%arg0: i32, %arg1: i32, %arg2: i32) -> (i32, i32) {
    %c0_i32 = arith.constant 0 : i32
    %c0_i32_0 = arith.constant 0 : i32
    return %arg0, %c0_i32 : i32, i32
  }
}

</mosaic_0001>

<llo_original>
// kernel: tpu_custom_call.1
$region0: #{tpu_custom_call.1}
  #allocation0 [shape = 'u32[]', space=smem, size = 0x4, offset = 0x4, fixed_abs, tag = 'smem constant byte address 0x4 - core index']
  #allocation1 [shape = 'u32[144,128]{1,0:T(1,128)}', space=vmem, size = 0x12000, scoped, tag = 'internal scratch']
  #allocation2 [shape = 'f32[128,32]{1,0:T(8,128)}', space=vmem, size = 0x10000, scoped, tag = 'scratch operand']
  #allocation3 [shape = 'f32[128,128]{1,0:T(8,128)}', space=vmem, size = 0x10000, scoped, tag = 'scratch operand']
  %s0 = inlined_call_operand.hbm [shape: f32[4,128,128], index: 0, kind: input, shape index: {}]
  %s1 = inlined_call_operand.vmem [shape: f32[128,32], index: 1, kind: input, shape index: {}]
  %s2 = inlined_call_operand.vmem [shape: f32[4,32,128], index: 2, kind: input, shape index: {}]
  %s3 = inlined_call_operand.vmem [shape: f32[128,32], index: 3, kind: input, shape index: {}]
  %s4 = inlined_call_operand.vmem [shape: f32[32,128], index: 4, kind: input, shape index: {}]
  %s5 = inlined_call_operand.vmem [shape: f32[128,1], index: 5, kind: input, shape index: {}]
  %s6 = inlined_call_operand.vmem [shape: f32[1,128], index: 6, kind: input, shape index: {}]
  %s7 = inlined_call_operand.hbm [shape: f32[128,128], index: 7, kind: output, shape index: {}]
  %s8 = sld [smem:[#allocation0]]
  $region81: #{tpu_custom_call.1} parent=0
    _
  %s10 = ssub.s32 1, %s8
  %s11 = scalar_select 0, %s10, %s8
  $region1: #{tpu_custom_call.1} parent=0
    #allocation4 [shape = 'u8[131072]{0}', space=vmem, size = 0x20000, scoped, tag = 'input window, operand 0']
    #allocation5 [shape = 's32[2]{0}', space=sflag, size = 0x8, scoped, tag = 'scoped memory for tpu_custom_call.1']
    #allocation6 [shape = 's32[2]{0}', space=sflag, size = 0x8, scoped, tag = 'scoped memory for tpu_custom_call.1']
    #allocation7 [shape = 'u8[65536]{0}', space=vmem, size = 0x10000, scoped, tag = 'output window, operand 0, single buffered']
    %12 = vsyncpa [#allocation5], 0
    %s13 = scalar_lea.sflag [#allocation5], 1
    %14 = vsyncpa %s13, 0
    %15 = vsyncpa [#allocation6], 0
    loop: start=0, step=1, limit=6
    $region2: #{tpu_custom_call.1} parent=1 // loop_pre_header
      _
    $region3: #{tpu_custom_call.1} parent=1 // loop_header
      %s17 = sphi 0, %s21
      %p18 = scmp.ge.s32.totalorder %s17, 6
      %s24 = sphi 0, %s43
      %s25 = sphi 0, %s39
      %s26 = sphi 0, %s35
      %s27 = sphi 0, %s24
      %s28 = sphi 0, %s25
      %s29 = sphi 0, %s26
      %s30 = sphi 0, %s27
      %s31 = sphi 0, %s28
      %s32 = sphi 0, %s29
      %s50 = sphi 0, %s52
      %s53 = sphi 0, %s50
      %s54 = sphi 0, %s53
      %s70 = sphi 0, %s54
      %s76 = sphi 0, %s78
      %s79 = sphi 0, %s76
      %s80 = sphi 0, %s79
      %s96 = sphi 0, %s80
      %s102 = sphi 0, %s104
      %s105 = sphi 0, %s102
      %s106 = sphi 0, %s105
      %s122 = sphi 0, %s106
      %s128 = sphi 0, %s130
      %s131 = sphi 0, %s128
      %s132 = sphi 0, %s131
      %s148 = sphi 0, %s132
      %s152 = sphi 0, %s152
      %s154 = sphi 0, %s152
      %s155 = sphi 0, %s154
      %s169 = sphi 0, %s155
      %s175 = sphi 0, %s177
      %s178 = sphi 0, %s175
      %s179 = sphi 0, %s178
      %s195 = sphi 0, %s179
      %s199 = sphi 0, %s199
      %s201 = sphi 0, %s199
      %s202 = sphi 0, %s201
      %s216 = sphi 0, %s202
      %s222 = sphi 0, %s224
      %s225 = sphi 0, %s222
      %s226 = sphi 0, %s225
      %s242 = sphi 0, %s226
    $region4: #{tpu_custom_call.1} parent=1 // loop_header_branch
      %20 = sbr.rel (%p18) target = $region8
    $region5: #{tpu_custom_call.1} parent=1 // loop_body
      %s22 = ssub.s32 %s17, 1
      %s23 = ssub.s32 %s17, 2
      %s33 = sadd.s32 1, %s26
      %p34 = scmp.ge.s32.totalorder %s33, 1
      %s35 = scalar_select %p34, 0, %s33
      %s36 = sadd.s32 1, %s25
      %s37 = scalar_select %p34, %s36, %s25
      %p38 = scmp.ge.s32.totalorder %s37, 4
      %s39 = scalar_select %p38, 0, %s37
      %s40 = sadd.s32 1, %s24
      %s41 = scalar_select %p38, %s40, %s24
      %p42 = scmp.ge.s32.totalorder %s41, 1
      %s43 = scalar_select %p42, 0, %s41
      %s44 = ssub.s32 %s25, %s39
      %s45 = ssub.s32 %s24, %s43
      %s46 = sor.u32 %s44, %s45
      %s47 = ssub.s32 %s26, %s35
      %s48 = sor.u32 %s46, %s47
      %p49 = scmp.eq.s32.totalorder %s48, 0
      %s51 = sadd.s32 %s50, 1
      %s52 = scalar_select %p49, %s50, %s51
      %p55 = pneg %p49
      %p56 = scmp.eq.s32.totalorder %s17, 3
      %p57 = por %p55, %p56
      %p58 = scmp.ne.s32.totalorder %s50, %s53
      %p59 = scmp.eq.s32.totalorder %s17, 0
      %p60 = por %p58, %p59
      %p61 = scmp.ne.s32.totalorder %s50, %s53
      %p62 = scmp.eq.s32.totalorder %s22, 3
      %p63 = por %p61, %p62
      %p64 = scmp.ne.s32.totalorder %s53, %s54
      %p65 = scmp.eq.s32.totalorder %s22, 0
      %p66 = por %p64, %p65
      %p67 = scmp.ne.s32.totalorder %s53, %s54
      %p68 = scmp.eq.s32.totalorder %s23, 3
      %p69 = por %p67, %p68
      %p71 = scmp.ne.s32.totalorder %s54, %s70
      %p72 = scmp.eq.s32.totalorder %s23, 0
      %p73 = por %p71, %p72
      %s74 = ssub.s32 %s26, %s35
      %p75 = scmp.eq.s32.totalorder %s74, 0
      %s77 = sadd.s32 %s76, 1
      %s78 = scalar_select %p75, %s76, %s77
      %p81 = pneg %p75
      %p82 = scmp.eq.s32.totalorder %s17, 3
      %p83 = por %p81, %p82
      %p84 = scmp.ne.s32.totalorder %s76, %s79
      %p85 = scmp.eq.s32.totalorder %s17, 0
      %p86 = por %p84, %p85
      %p87 = scmp.ne.s32.totalorder %s76, %s79
      %p88 = scmp.eq.s32.totalorder %s22, 3
      %p89 = por %p87, %p88
      %p90 = scmp.ne.s32.totalorder %s79, %s80
      %p91 = scmp.eq.s32.totalorder %s22, 0
      %p92 = por %p90, %p91
      %p93 = scmp.ne.s32.totalorder %s79, %s80
      %p94 = scmp.eq.s32.totalorder %s23, 3
      %p95 = por %p93, %p94
      %p97 = scmp.ne.s32.totalorder %s80, %s96
      %p98 = scmp.eq.s32.totalorder %s23, 0
      %p99 = por %p97, %p98
      %s100 = ssub.s32 %s25, %s39
      %p101 = scmp.eq.s32.totalorder %s100, 0
      %s103 = sadd.s32 %s102, 1
      %s104 = scalar_select %p101, %s102, %s103
      %p107 = pneg %p101
      %p108 = scmp.eq.s32.totalorder %s17, 3
      %p109 = por %p107, %p108
      %p110 = scmp.ne.s32.totalorder %s102, %s105
      %p111 = scmp.eq.s32.totalorder %s17, 0
      %p112 = por %p110, %p111
      %p113 = scmp.ne.s32.totalorder %s102, %s105
      %p114 = scmp.eq.s32.totalorder %s22, 3
      %p115 = por %p113, %p114
      %p116 = scmp.ne.s32.totalorder %s105, %s106
      %p117 = scmp.eq.s32.totalorder %s22, 0
      %p118 = por %p116, %p117
      %p119 = scmp.ne.s32.totalorder %s105, %s106
      %p120 = scmp.eq.s32.totalorder %s23, 3
      %p121 = por %p119, %p120
      %p123 = scmp.ne.s32.totalorder %s106, %s122
      %p124 = scmp.eq.s32.totalorder %s23, 0
      %p125 = por %p123, %p124
      %s126 = ssub.s32 %s24, %s43
      %p127 = scmp.eq.s32.totalorder %s126, 0
      %s129 = sadd.s32 %s128, 1
      %s130 = scalar_select %p127, %s128, %s129
      %p133 = pneg %p127
      %p134 = scmp.eq.s32.totalorder %s17, 3
      %p135 = por %p133, %p134
      %p136 = scmp.ne.s32.totalorder %s128, %s131
      %p137 = scmp.eq.s32.totalorder %s17, 0
      %p138 = por %p136, %p137
      %p139 = scmp.ne.s32.totalorder %s128, %s131
      %p140 = scmp.eq.s32.totalorder %s22, 3
      %p141 = por %p139, %p140
      %p142 = scmp.ne.s32.totalorder %s131, %s132
      %p143 = scmp.eq.s32.totalorder %s22, 0
      %p144 = por %p142, %p143
      %p145 = scmp.ne.s32.totalorder %s131, %s132
      %p146 = scmp.eq.s32.totalorder %s23, 3
      %p147 = por %p145, %p146
      %p149 = scmp.ne.s32.totalorder %s132, %s148
      %p150 = scmp.eq.s32.totalorder %s23, 0
      %p151 = por %p149, %p150
      %s153 = sadd.s32 %s152, 1
      %p156 = scmp.eq.s32.totalorder %s17, 3
      %p157 = scmp.ne.s32.totalorder %s152, %s154
      %p158 = scmp.eq.s32.totalorder %s17, 0
      %p159 = por %p157, %p158
      %p160 = scmp.ne.s32.totalorder %s152, %s154
      %p161 = scmp.eq.s32.totalorder %s22, 3
      %p162 = por %p160, %p161
      %p163 = scmp.ne.s32.totalorder %s154, %s155
      %p164 = scmp.eq.s32.totalorder %s22, 0
      %p165 = por %p163, %p164
      %p166 = scmp.ne.s32.totalorder %s154, %s155
      %p167 = scmp.eq.s32.totalorder %s23, 3
      %p168 = por %p166, %p167
      %p170 = scmp.ne.s32.totalorder %s155, %s169
      %p171 = scmp.eq.s32.totalorder %s23, 0
      %p172 = por %p170, %p171
      %s173 = ssub.s32 %s24, %s43
      %p174 = scmp.eq.s32.totalorder %s173, 0
      %s176 = sadd.s32 %s175, 1
      %s177 = scalar_select %p174, %s175, %s176
      %p180 = pneg %p174
      %p181 = scmp.eq.s32.totalorder %s17, 3
      %p182 = por %p180, %p181
      %p183 = scmp.ne.s32.totalorder %s175, %s178
      %p184 = scmp.eq.s32.totalorder %s17, 0
      %p185 = por %p183, %p184
      %p186 = scmp.ne.s32.totalorder %s175, %s178
      %p187 = scmp.eq.s32.totalorder %s22, 3
      %p188 = por %p186, %p187
      %p189 = scmp.ne.s32.totalorder %s178, %s179
      %p190 = scmp.eq.s32.totalorder %s22, 0
      %p191 = por %p189, %p190
      %p192 = scmp.ne.s32.totalorder %s178, %s179
      %p193 = scmp.eq.s32.totalorder %s23, 3
      %p194 = por %p192, %p193
      %p196 = scmp.ne.s32.totalorder %s179, %s195
      %p197 = scmp.eq.s32.totalorder %s23, 0
      %p198 = por %p196, %p197
      %s200 = sadd.s32 %s199, 1
      %p203 = scmp.eq.s32.totalorder %s17, 3
      %p204 = scmp.ne.s32.totalorder %s199, %s201
      %p205 = scmp.eq.s32.totalorder %s17, 0
      %p206 = por %p204, %p205
      %p207 = scmp.ne.s32.totalorder %s199, %s201
      %p208 = scmp.eq.s32.totalorder %s22, 3
      %p209 = por %p207, %p208
      %p210 = scmp.ne.s32.totalorder %s201, %s202
      %p211 = scmp.eq.s32.totalorder %s22, 0
      %p212 = por %p210, %p211
      %p213 = scmp.ne.s32.totalorder %s201, %s202
      %p214 = scmp.eq.s32.totalorder %s23, 3
      %p215 = por %p213, %p214
      %p217 = scmp.ne.s32.totalorder %s202, %s216
      %p218 = scmp.eq.s32.totalorder %s23, 0
      %p219 = por %p217, %p218
      %s220 = ssub.s32 %s24, %s43
      %p221 = scmp.eq.s32.totalorder %s220, 0
      %s223 = sadd.s32 %s222, 1
      %s224 = scalar_select %p221, %s222, %s223
      %p227 = pneg %p221
      %p228 = scmp.eq.s32.totalorder %s17, 3
      %p229 = por %p227, %p228
      %p230 = scmp.ne.s32.totalorder %s222, %s225
      %p231 = scmp.eq.s32.totalorder %s17, 0
      %p232 = por %p230, %p231
      %p233 = scmp.ne.s32.totalorder %s222, %s225
      %p234 = scmp.eq.s32.totalorder %s22, 3
      %p235 = por %p233, %p234
      %p236 = scmp.ne.s32.totalorder %s225, %s226
      %p237 = scmp.eq.s32.totalorder %s22, 0
      %p238 = por %p236, %p237
      %p239 = scmp.ne.s32.totalorder %s225, %s226
      %p240 = scmp.eq.s32.totalorder %s23, 3
      %p241 = por %p239, %p240
      %p243 = scmp.ne.s32.totalorder %s226, %s242
      %p244 = scmp.eq.s32.totalorder %s23, 0
      %p245 = por %p243, %p244
      %p246 = scmp.le.s32.totalorder 1, %s17
      %p247 = scmp.lt.s32.totalorder %s17, 5
      %p248 = pnand %p246, %p247
      %p249 = pneg %p248
      // Predicated region
      $region9: #{tpu_custom_call.1} parent=5 // pred_check
        _
      $region10: #{tpu_custom_call.1} parent=5 // pred_check_branch
        %251 = sbr.rel (%p248) target = $region12
      $region11: #{tpu_custom_call.1} parent=5 // pred_region
        %s252 = ssub.s32 %s17, 1
        // Predicated region
        $region13: #{tpu_custom_call.1} parent=11 // pred_check
          %p253 = pneg %p92
        $region14: #{tpu_custom_call.1} parent=11 // pred_check_branch
          %255 = sbr.rel (%p253) target = $region16
        $region15: #{tpu_custom_call.1} parent=11 // pred_region
          %s256 = smul.u32 16, %s29
          %p257 = scmp.lt.s32.totalorder %s256, 15
          %s258 = scalar_select %p257, %s256, 15
          %s259 = smul.addr %s258, 8
          %s260 = scalar_lea.vmem %s1, %s259
          %s261 = smul.u32 16, %s29
        $region16: #{tpu_custom_call.1} parent=11 // pred_fallthru
          _
        // Predicated region
        $region17: #{tpu_custom_call.1} parent=11 // pred_check
          %p262 = pneg %p144
        $region18: #{tpu_custom_call.1} parent=11 // pred_check_branch
          %264 = sbr.rel (%p262) target = $region20
        $region19: #{tpu_custom_call.1} parent=11 // pred_region
          %s265 = smul.u32 16, %s27
          %p266 = scmp.lt.s32.totalorder %s265, 15
          %s267 = scalar_select %p266, %s265, 15
          %s268 = smul.addr %s267, 8
          %s269 = scalar_lea.vmem %s3, %s268
          %s270 = smul.u32 16, %s27
        $region20: #{tpu_custom_call.1} parent=11 // pred_fallthru
          _
        // Predicated region
        $region21: #{tpu_custom_call.1} parent=11 // pred_check
          %p271 = pneg %p165
        $region22: #{tpu_custom_call.1} parent=11 // pred_check_branch
          %273 = sbr.rel (%p271) target = $region24
        $region23: #{tpu_custom_call.1} parent=11 // pred_region
          _
        $region24: #{tpu_custom_call.1} parent=11 // pred_fallthru
          _
        // Predicated region
        $region25: #{tpu_custom_call.1} parent=11 // pred_check
          %p274 = pneg %p191
        $region26: #{tpu_custom_call.1} parent=11 // pred_check_branch
          %276 = sbr.rel (%p274) target = $region28
        $region27: #{tpu_custom_call.1} parent=11 // pred_region
          %s277 = smul.u32 16, %s27
          %p278 = scmp.lt.s32.totalorder %s277, 15
          %s279 = scalar_select %p278, %s277, 15
          %s280 = smul.addr %s279, 8
          %s281 = scalar_lea.vmem %s5, %s280
          %s282 = smul.u32 16, %s27
        $region28: #{tpu_custom_call.1} parent=11 // pred_fallthru
          _
        // Predicated region
        $region29: #{tpu_custom_call.1} parent=11 // pred_check
          %p283 = pneg %p212
        $region30: #{tpu_custom_call.1} parent=11 // pred_check_branch
          %285 = sbr.rel (%p283) target = $region32
        $region31: #{tpu_custom_call.1} parent=11 // pred_region
          _
        $region32: #{tpu_custom_call.1} parent=11 // pred_fallthru
          _
      $region12: #{tpu_custom_call.1} parent=5 // pred_fallthru
        _
      %p286 = scmp.lt.s32.totalorder %s17, 4
      // Predicated region
      $region33: #{tpu_custom_call.1} parent=5 // pred_check
        %p287 = pneg %p286
      $region34: #{tpu_custom_call.1} parent=5 // pred_check_branch
        %289 = sbr.rel (%p287) target = $region36
      $region35: #{tpu_custom_call.1} parent=5 // pred_region
        // Predicated region
        $region37: #{tpu_custom_call.1} parent=35 // pred_check
          %p290 = pneg %p60
        $region38: #{tpu_custom_call.1} parent=35 // pred_check_branch
          %292 = sbr.rel (%p290) target = $region40
        $region39: #{tpu_custom_call.1} parent=35 // pred_region
          %s293 = sand.u32 %s50, 1
          %s294 = scalar_lea.sflag [#allocation5], %s293
          %s295 = sand.u32 %s50, 1
          %s296 = smul.addr %s295, 128
          %s297 = scalar_lea.vmem [#allocation4], %s296
          %s298 = smul.u32 16, %s24
          %s300 = ssub.s32 2048, 2048
          %301 = vsyncadd %s294, %s300
          %s302 = sadd.s32 %s26, %s298
          %s303 = smul.addr %s25, 16
          %s304 = sadd.s32 %s302, %s303
          %s305 = smul.addr %s304, 128
          %s306 = scalar_lea.hbm %s0, %s305
          %s307 = sshll.u32 %s297, 4
          %s308 = int_to_ptr.vmem [resolvable:$true] %s307
          %313 = dma.hbm_to_vmem [thread:$0]  %s306, 2048, %s308, %s294, 128, 128, 8
        $region40: #{tpu_custom_call.1} parent=35 // pred_fallthru
          _
        // Predicated region
        $region41: #{tpu_custom_call.1} parent=35 // pred_check
          %p314 = pneg %p112
        $region42: #{tpu_custom_call.1} parent=35 // pred_check_branch
          %316 = sbr.rel (%p314) target = $region44
        $region43: #{tpu_custom_call.1} parent=35 // pred_region
          %p317 = scmp.lt.s32.totalorder %s25, 3
          %s318 = scalar_select %p317, %s25, 3
          %s319 = smul.addr %s318, 4
          %s320 = smul.addr %s319, 8
          %s321 = scalar_lea.vmem %s2, %s320
        $region44: #{tpu_custom_call.1} parent=35 // pred_fallthru
          _
      $region36: #{tpu_custom_call.1} parent=5 // pred_fallthru
        _
      %p322 = scmp.le.s32.totalorder 1, %s17
      %p323 = scmp.lt.s32.totalorder %s17, 5
      %p324 = pnand %p322, %p323
      %p325 = pneg %p324
      // Predicated region
      $region45: #{tpu_custom_call.1} parent=5 // pred_check
        _
      $region46: #{tpu_custom_call.1} parent=5 // pred_check_branch
        %327 = sbr.rel (%p324) target = $region48
      $region47: #{tpu_custom_call.1} parent=5 // pred_region
        %s328 = ssub.s32 %s17, 1
        %s329 = sand.u32 %s53, 1
        %s330 = scalar_lea.sflag [#allocation5], %s329
        %s331 = sand.u32 %s53, 1
        %s332 = smul.addr %s331, 128
        %s333 = scalar_lea.vmem [#allocation4], %s332
        // Predicated region
        $region49: #{tpu_custom_call.1} parent=47 // pred_check
          %p334 = pneg %p66
        $region50: #{tpu_custom_call.1} parent=47 // pred_check_branch
          %336 = sbr.rel (%p334) target = $region52
        $region51: #{tpu_custom_call.1} parent=47 // pred_region
          %337 = dma.done %s330, 2048
        $region52: #{tpu_custom_call.1} parent=47 // pred_fallthru
          _
        %s338 = sand.u32 %s53, 1
        %s339 = scalar_lea.sflag [#allocation5], %s338
        %s340 = sand.u32 %s53, 1
        %s341 = smul.addr %s340, 128
        %s342 = scalar_lea.vmem [#allocation4], %s341
        %p343 = pneg %p66
        %p344 = pneg %p63
        %s345 = smul.u32 16, %s29
        %p346 = scmp.lt.s32.totalorder %s345, 15
        %s347 = scalar_select %p346, %s345, 15
        %s348 = smul.addr %s347, 8
        %s349 = scalar_lea.vmem %s1, %s348
        %p350 = pneg %p92
        %p351 = pneg %p89
        %p352 = scmp.lt.s32.totalorder %s28, 3
        %s353 = scalar_select %p352, %s28, 3
        %s354 = smul.addr %s353, 4
        %s355 = smul.addr %s354, 8
        %s356 = scalar_lea.vmem %s2, %s355
        %p357 = pneg %p118
        %p358 = pneg %p115
        %s359 = smul.u32 16, %s27
        %p360 = scmp.lt.s32.totalorder %s359, 15
        %s361 = scalar_select %p360, %s359, 15
        %s362 = smul.addr %s361, 8
        %s363 = scalar_lea.vmem %s3, %s362
        %p364 = pneg %p144
        %p365 = pneg %p141
        %p366 = pneg %p165
        %p367 = pneg %p162
        %s368 = smul.u32 16, %s27
        %p369 = scmp.lt.s32.totalorder %s368, 15
        %s370 = scalar_select %p369, %s368, 15
        %s371 = smul.addr %s370, 8
        %s372 = scalar_lea.vmem %s5, %s371
        %p373 = pneg %p191
        %p374 = pneg %p188
        %p375 = pneg %p212
        %p376 = pneg %p209
        %p377 = pneg %p238
        %p378 = pneg %p235
        %s379 = smul.u32 16, %s27
        %s380 = smul.u32 16, %s29
        %p381 = scmp.lt.s32.totalorder %s380, 15
        %s382 = scalar_select %p381, %s380, 15
        %s383 = smul.addr %s382, 8
        %s384 = scalar_lea.vmem %s1, %s383
        %s385 = smul.u32 16, %s29
        %p386 = scmp.lt.s32.totalorder %s28, 3
        %s387 = scalar_select %p386, %s28, 3
        %s388 = smul.addr %s387, 4
        %s389 = smul.addr %s388, 8
        %s390 = scalar_lea.vmem %s2, %s389
        %s391 = smul.u32 16, %s27
        %p392 = scmp.lt.s32.totalorder %s391, 15
        %s393 = scalar_select %p392, %s391, 15
        %s394 = smul.addr %s393, 8
        %s395 = scalar_lea.vmem %s3, %s394
        %s396 = smul.u32 16, %s27
        %s397 = smul.u32 16, %s27
        %p398 = scmp.lt.s32.totalorder %s397, 15
        %s399 = scalar_select %p398, %s397, 15
        %s400 = smul.addr %s399, 8
        %s401 = scalar_lea.vmem %s5, %s400
        %s402 = smul.u32 16, %s27
        %s403 = smul.u32 16, %s27
        %p404 = scmp.eq.s32.totalorder %s28, 0
        %p405 = scmp.eq.s32.totalorder %s29, 0
        %p406 = pnand %p404, %p405
        %p407 = pneg %p406
        // Predicated region
        $region53: #{tpu_custom_call.1} parent=47 // pred_check
          _
        $region54: #{tpu_custom_call.1} parent=47 // pred_check_branch
          %409 = sbr.rel (%p406) target = $region56
        $region55: #{tpu_custom_call.1} parent=47 // pred_region
          %410 = vst [vmem:[#allocation3] sm:$0xff] 0.0
          %411 = vst [vmem:[#allocation3 + $0x8] sm:$0xff] 0.0
          %412 = vst [vmem:[#allocation3 + $0x10] sm:$0xff] 0.0
          %413 = vst [vmem:[#allocation3 + $0x18] sm:$0xff] 0.0
          %414 = vst [vmem:[#allocation3 + $0x20] sm:$0xff] 0.0
          %415 = vst [vmem:[#allocation3 + $0x28] sm:$0xff] 0.0
          %416 = vst [vmem:[#allocation3 + $0x30] sm:$0xff] 0.0
          %417 = vst [vmem:[#allocation3 + $0x38] sm:$0xff] 0.0
          %418 = vst [vmem:[#allocation3 + $0x40] sm:$0xff] 0.0
          %419 = vst [vmem:[#allocation3 + $0x48] sm:$0xff] 0.0
          %420 = vst [vmem:[#allocation3 + $0x50] sm:$0xff] 0.0
          %421 = vst [vmem:[#allocation3 + $0x58] sm:$0xff] 0.0
          %422 = vst [vmem:[#allocation3 + $0x60] sm:$0xff] 0.0
          %423 = vst [vmem:[#allocation3 + $0x68] sm:$0xff] 0.0
          %424 = vst [vmem:[#allocation3 + $0x70] sm:$0xff] 0.0
          %425 = vst [vmem:[#allocation3 + $0x78] sm:$0xff] 0.0
        $region56: #{tpu_custom_call.1} parent=47 // pred_fallthru
          _
        // Predicated region
        $region57: #{tpu_custom_call.1} parent=47 // pred_check
          %p426 = pneg %p405
        $region58: #{tpu_custom_call.1} parent=47 // pred_check_branch
          %428 = sbr.rel (%p426) target = $region60
        $region59: #{tpu_custom_call.1} parent=47 // pred_region
          %vm429 = vcmask 261120
          %430 = vst.msk [vmem:[#allocation2] sm:$0xff] %vm429, 0.0
          %431 = vst.msk [vmem:[#allocation2 + $0x8] sm:$0xff] %vm429, 0.0
          %432 = vst.msk [vmem:[#allocation2 + $0x10] sm:$0xff] %vm429, 0.0
          %433 = vst.msk [vmem:[#allocation2 + $0x18] sm:$0xff] %vm429, 0.0
          %434 = vst.msk [vmem:[#allocation2 + $0x20] sm:$0xff] %vm429, 0.0
          %435 = vst.msk [vmem:[#allocation2 + $0x28] sm:$0xff] %vm429, 0.0
          %436 = vst.msk [vmem:[#allocation2 + $0x30] sm:$0xff] %vm429, 0.0
          %437 = vst.msk [vmem:[#allocation2 + $0x38] sm:$0xff] %vm429, 0.0
          %438 = vst.msk [vmem:[#allocation2 + $0x40] sm:$0xff] %vm429, 0.0
          %439 = vst.msk [vmem:[#allocation2 + $0x48] sm:$0xff] %vm429, 0.0
          %440 = vst.msk [vmem:[#allocation2 + $0x50] sm:$0xff] %vm429, 0.0
          %441 = vst.msk [vmem:[#allocation2 + $0x58] sm:$0xff] %vm429, 0.0
          %442 = vst.msk [vmem:[#allocation2 + $0x60] sm:$0xff] %vm429, 0.0
          %443 = vst.msk [vmem:[#allocation2 + $0x68] sm:$0xff] %vm429, 0.0
          %444 = vst.msk [vmem:[#allocation2 + $0x70] sm:$0xff] %vm429, 0.0
          %445 = vst.msk [vmem:[#allocation2 + $0x78] sm:$0xff] %vm429, 0.0
        $region60: #{tpu_custom_call.1} parent=47 // pred_fallthru
          _
        %v446 = vld [vmem:[#allocation2] sm:$0xff]
        %v447 = vld [vmem:[#allocation2 + $0x8] sm:$0xff]
        %v448 = vld [vmem:[#allocation2 + $0x10] sm:$0xff]
        %v449 = vld [vmem:[#allocation2 + $0x18] sm:$0xff]
        %v450 = vld [vmem:[#allocation2 + $0x20] sm:$0xff]
        %v451 = vld [vmem:[#allocation2 + $0x28] sm:$0xff]
        %v452 = vld [vmem:[#allocation2 + $0x30] sm:$0xff]
        %v453 = vld [vmem:[#allocation2 + $0x38] sm:$0xff]
        %v454 = vld [vmem:[#allocation2 + $0x40] sm:$0xff]
        %v455 = vld [vmem:[#allocation2 + $0x48] sm:$0xff]
        %v456 = vld [vmem:[#allocation2 + $0x50] sm:$0xff]
        %v457 = vld [vmem:[#allocation2 + $0x58] sm:$0xff]
        %v458 = vld [vmem:[#allocation2 + $0x60] sm:$0xff]
        %v459 = vld [vmem:[#allocation2 + $0x68] sm:$0xff]
        %v460 = vld [vmem:[#allocation2 + $0x70] sm:$0xff]
        %v461 = vld [vmem:[#allocation2 + $0x78] sm:$0xff]
        %v462 = vld [vmem:[%s333] sm:$0xff]
        %v463 = vld [vmem:[%s333 + $0x8] sm:$0xff]
        %v464 = vld [vmem:[%s333 + $0x10] sm:$0xff]
        %v465 = vld [vmem:[%s333 + $0x18] sm:$0xff]
        %v466 = vld [vmem:[%s333 + $0x20] sm:$0xff]
        %v467 = vld [vmem:[%s333 + $0x28] sm:$0xff]
        %v468 = vld [vmem:[%s333 + $0x30] sm:$0xff]
        %v469 = vld [vmem:[%s333 + $0x38] sm:$0xff]
        %v470 = vld [vmem:[%s333 + $0x40] sm:$0xff]
        %v471 = vld [vmem:[%s333 + $0x48] sm:$0xff]
        %v472 = vld [vmem:[%s333 + $0x50] sm:$0xff]
        %v473 = vld [vmem:[%s333 + $0x58] sm:$0xff]
        %v474 = vld [vmem:[%s333 + $0x60] sm:$0xff]
        %v475 = vld [vmem:[%s333 + $0x68] sm:$0xff]
        %v476 = vld [vmem:[%s333 + $0x70] sm:$0xff]
        %v477 = vld [vmem:[%s333 + $0x78] sm:$0xff]
        %v478 = vld [vmem:[%s384] sm:$0xff]
        %v479 = vld [vmem:[%s384 + $0x8] sm:$0xff]
        %v480 = vld [vmem:[%s384 + $0x10] sm:$0xff]
        %v481 = vld [vmem:[%s384 + $0x18] sm:$0xff]
        %v482 = vld [vmem:[%s384 + $0x20] sm:$0xff]
        %v483 = vld [vmem:[%s384 + $0x28] sm:$0xff]
        %v484 = vld [vmem:[%s384 + $0x30] sm:$0xff]
        %v485 = vld [vmem:[%s384 + $0x38] sm:$0xff]
        %v486 = vld [vmem:[%s384 + $0x40] sm:$0xff]
        %v487 = vld [vmem:[%s384 + $0x48] sm:$0xff]
        %v488 = vld [vmem:[%s384 + $0x50] sm:$0xff]
        %v489 = vld [vmem:[%s384 + $0x58] sm:$0xff]
        %v490 = vld [vmem:[%s384 + $0x60] sm:$0xff]
        %v491 = vld [vmem:[%s384 + $0x68] sm:$0xff]
        %v492 = vld [vmem:[%s384 + $0x70] sm:$0xff]
        %v493 = vld [vmem:[%s384 + $0x78] sm:$0xff]
        %494 = vmatprep.subr.mxu0 0.0
        %495 = vmatpush1.msra.mxu0 %v493
        %496 = vmatprep.subr.mxu0 0.0
        %497 = vmatpush1.msra.mxu0 %v492
        %498 = vmatprep.subr.mxu0 0.0
        %499 = vmatpush1.msra.mxu0 %v491
        %500 = vmatprep.subr.mxu0 0.0
        %501 = vmatpush1.msra.mxu0 %v490
        %502 = vmatprep.subr.mxu0 0.0
        %503 = vmatpush1.msra.mxu0 %v489
        %504 = vmatprep.subr.mxu0 0.0
        %505 = vmatpush1.msra.mxu0 %v488
        %506 = vmatprep.subr.mxu0 0.0
        %507 = vmatpush1.msra.mxu0 %v487
        %508 = vmatprep.subr.mxu0 0.0
        %509 = vmatpush1.msra.mxu0 %v486
        %510 = vmatprep.subr.mxu0 0.0
        %511 = vmatpush1.msra.mxu0 %v485
        %512 = vmatprep.subr.mxu0 0.0
        %513 = vmatpush1.msra.mxu0 %v484
        %514 = vmatprep.subr.mxu0 0.0
        %515 = vmatpush1.msra.mxu0 %v483
        %516 = vmatprep.subr.mxu0 0.0
        %517 = vmatpush1.msra.mxu0 %v482
        %518 = vmatprep.subr.mxu0 0.0
        %519 = vmatpush1.msra.mxu0 %v481
        %520 = vmatprep.subr.mxu0 0.0
        %521 = vmatpush1.msra.mxu0 %v480
        %522 = vmatprep.subr.mxu0 0.0
        %523 = vmatpush1.msra.mxu0 %v479
        %524 = vmatprep.subr.mxu0 0.0
        %525 = vmatpush1.msra.mxu0 %v478
        %526 = vmatprep.subr.mxu0 0.0
        %527 = vmatpush2.msra.mxu0 0.0
        %528 = vmatprep.subr.mxu0 0.0
        %529 = vmatpush2.msra.mxu0 0.0
        %530 = vmatprep.subr.mxu0 0.0
        %531 = vmatpush2.msra.mxu0 0.0
        %532 = vmatprep.subr.mxu0 0.0
        %533 = vmatpush2.msra.mxu0 0.0
        %534 = vmatprep.subr.mxu0 0.0
        %535 = vmatpush2.msra.mxu0 0.0
        %536 = vmatprep.subr.mxu0 0.0
        %537 = vmatpush2.msra.mxu0 0.0
        %538 = vmatprep.subr.mxu0 0.0
        %539 = vmatpush2.msra.mxu0 0.0
        %540 = vmatprep.subr.mxu0 0.0
        %541 = vmatpush2.msra.mxu0 0.0
        %542 = vmatprep.subr.mxu0 0.0
        %543 = vmatpush2.msra.mxu0 0.0
        %544 = vmatprep.subr.mxu0 0.0
        %545 = vmatpush2.msra.mxu0 0.0
        %546 = vmatprep.subr.mxu0 0.0
        %547 = vmatpush2.msra.mxu0 0.0
        %548 = vmatprep.subr.mxu0 0.0
        %549 = vmatpush2.msra.mxu0 0.0
        %550 = vmatprep.subr.mxu0 0.0
        %551 = vmatpush2.msra.mxu0 0.0
        %552 = vmatprep.subr.mxu0 0.0
        %553 = vmatpush2.msra.mxu0 0.0
        %554 = vmatprep.subr.mxu0 0.0
        %555 = vmatpush2.msra.mxu0 0.0
        %556 = vmatprep.subr.mxu0 0.0
        %557 = vmatpush2.msra.mxu0 0.0
        %558 = vmatprep.mubr.f32.mxu0 0.0
        %559 = vmatmul.mubr.f32.gmra.mxu0 %v462
        %v560 = vpop.f32.mrf.mxu0
        %v561 = vadd.f32 0.0, %v560
        %v562 = vpop.f32.mrf.mxu0
        %563 = vmatprep.mubr.f32.mxu0 0.0
        %564 = vmatmul.mubr.f32.gmra.mxu0 %v463
        %v565 = vpop.f32.mrf.mxu0
        %v566 = vadd.f32 0.0, %v565
        %v567 = vpop.f32.mrf.mxu0
        %568 = vmatprep.mubr.f32.mxu0 0.0
        %569 = vmatmul.mubr.f32.gmra.mxu0 %v464
        %v570 = vpop.f32.mrf.mxu0
        %v571 = vadd.f32 0.0, %v570
        %v572 = vpop.f32.mrf.mxu0
        %573 = vmatprep.mubr.f32.mxu0 0.0
        %574 = vmatmul.mubr.f32.gmra.mxu0 %v465
        %v575 = vpop.f32.mrf.mxu0
        %v576 = vadd.f32 0.0, %v575
        %v577 = vpop.f32.mrf.mxu0
        %578 = vmatprep.mubr.f32.mxu0 0.0
        %579 = vmatmul.mubr.f32.gmra.mxu0 %v466
        %v580 = vpop.f32.mrf.mxu0
        %v581 = vadd.f32 0.0, %v580
        %v582 = vpop.f32.mrf.mxu0
        %583 = vmatprep.mubr.f32.mxu0 0.0
        %584 = vmatmul.mubr.f32.gmra.mxu0 %v467
        %v585 = vpop.f32.mrf.mxu0
        %v586 = vadd.f32 0.0, %v585
        %v587 = vpop.f32.mrf.mxu0
        %588 = vmatprep.mubr.f32.mxu0 0.0
        %589 = vmatmul.mubr.f32.gmra.mxu0 %v468
        %v590 = vpop.f32.mrf.mxu0
        %v591 = vadd.f32 0.0, %v590
        %v592 = vpop.f32.mrf.mxu0
        %593 = vmatprep.mubr.f32.mxu0 0.0
        %594 = vmatmul.mubr.f32.gmra.mxu0 %v469
        %v595 = vpop.f32.mrf.mxu0
        %v596 = vadd.f32 0.0, %v595
        %v597 = vpop.f32.mrf.mxu0
        %598 = vmatprep.mubr.f32.mxu0 0.0
        %599 = vmatmul.mubr.f32.gmra.mxu0 %v470
        %v600 = vpop.f32.mrf.mxu0
        %v601 = vadd.f32 0.0, %v600
        %v602 = vpop.f32.mrf.mxu0
        %603 = vmatprep.mubr.f32.mxu0 0.0
        %604 = vmatmul.mubr.f32.gmra.mxu0 %v471
        %v605 = vpop.f32.mrf.mxu0
        %v606 = vadd.f32 0.0, %v605
        %v607 = vpop.f32.mrf.mxu0
        %608 = vmatprep.mubr.f32.mxu0 0.0
        %609 = vmatmul.mubr.f32.gmra.mxu0 %v472
        %v610 = vpop.f32.mrf.mxu0
        %v611 = vadd.f32 0.0, %v610
        %v612 = vpop.f32.mrf.mxu0
        %613 = vmatprep.mubr.f32.mxu0 0.0
        %614 = vmatmul.mubr.f32.gmra.mxu0 %v473
        %v615 = vpop.f32.mrf.mxu0
        %v616 = vadd.f32 0.0, %v615
        %v617 = vpop.f32.mrf.mxu0
        %618 = vmatprep.mubr.f32.mxu0 0.0
        %619 = vmatmul.mubr.f32.gmra.mxu0 %v474
        %v620 = vpop.f32.mrf.mxu0
        %v621 = vadd.f32 0.0, %v620
        %v622 = vpop.f32.mrf.mxu0
        %623 = vmatprep.mubr.f32.mxu0 0.0
        %624 = vmatmul.mubr.f32.gmra.mxu0 %v475
        %v625 = vpop.f32.mrf.mxu0
        %v626 = vadd.f32 0.0, %v625
        %v627 = vpop.f32.mrf.mxu0
        %628 = vmatprep.mubr.f32.mxu0 0.0
        %629 = vmatmul.mubr.f32.gmra.mxu0 %v476
        %v630 = vpop.f32.mrf.mxu0
        %v631 = vadd.f32 0.0, %v630
        %v632 = vpop.f32.mrf.mxu0
        %633 = vmatprep.mubr.f32.mxu0 0.0
        %634 = vmatmul.mubr.f32.gmra.mxu0 %v477
        %v635 = vpop.f32.mrf.mxu0
        %v636 = vadd.f32 0.0, %v635
        %v637 = vpop.f32.mrf.mxu0
        %638 = vdwg.mxu0
        %v639 = vadd.f32 %v446, %v561
        %v640 = vadd.f32 %v447, %v566
        %v641 = vadd.f32 %v448, %v571
        %v642 = vadd.f32 %v449, %v576
        %v643 = vadd.f32 %v450, %v581
        %v644 = vadd.f32 %v451, %v586
        %v645 = vadd.f32 %v452, %v591
        %v646 = vadd.f32 %v453, %v596
        %v647 = vadd.f32 %v454, %v601
        %v648 = vadd.f32 %v455, %v606
        %v649 = vadd.f32 %v456, %v611
        %v650 = vadd.f32 %v457, %v616
        %v651 = vadd.f32 %v458, %v621
        %v652 = vadd.f32 %v459, %v626
        %v653 = vadd.f32 %v460, %v631
        %v654 = vadd.f32 %v461, %v636
        %vm655 = vcmask 261120
        %656 = vst.msk [vmem:[#allocation2] sm:$0xff] %vm655, %v639
        %657 = vst.msk [vmem:[#allocation2 + $0x8] sm:$0xff] %vm655, %v640
        %658 = vst.msk [vmem:[#allocation2 + $0x10] sm:$0xff] %vm655, %v641
        %659 = vst.msk [vmem:[#allocation2 + $0x18] sm:$0xff] %vm655, %v642
        %660 = vst.msk [vmem:[#allocation2 + $0x20] sm:$0xff] %vm655, %v643
        %661 = vst.msk [vmem:[#allocation2 + $0x28] sm:$0xff] %vm655, %v644
        %662 = vst.msk [vmem:[#allocation2 + $0x30] sm:$0xff] %vm655, %v645
        %663 = vst.msk [vmem:[#allocation2 + $0x38] sm:$0xff] %vm655, %v646
        %664 = vst.msk [vmem:[#allocation2 + $0x40] sm:$0xff] %vm655, %v647
        %665 = vst.msk [vmem:[#allocation2 + $0x48] sm:$0xff] %vm655, %v648
        %666 = vst.msk [vmem:[#allocation2 + $0x50] sm:$0xff] %vm655, %v649
        %667 = vst.msk [vmem:[#allocation2 + $0x58] sm:$0xff] %vm655, %v650
        %668 = vst.msk [vmem:[#allocation2 + $0x60] sm:$0xff] %vm655, %v651
        %669 = vst.msk [vmem:[#allocation2 + $0x68] sm:$0xff] %vm655, %v652
        %670 = vst.msk [vmem:[#allocation2 + $0x70] sm:$0xff] %vm655, %v653
        %671 = vst.msk [vmem:[#allocation2 + $0x78] sm:$0xff] %vm655, %v654
        // Predicated region
        $region61: #{tpu_custom_call.1} parent=47 // pred_check
          %p672 = pneg %p405
        $region62: #{tpu_custom_call.1} parent=47 // pred_check_branch
          %674 = sbr.rel (%p672) target = $region64
        $region63: #{tpu_custom_call.1} parent=47 // pred_region
          %v675 = vld [vmem:[#allocation3] sm:$0xff]
          %v676 = vld [vmem:[#allocation3 + $0x8] sm:$0xff]
          %v677 = vld [vmem:[#allocation3 + $0x10] sm:$0xff]
          %v678 = vld [vmem:[#allocation3 + $0x18] sm:$0xff]
          %v679 = vld [vmem:[#allocation3 + $0x20] sm:$0xff]
          %v680 = vld [vmem:[#allocation3 + $0x28] sm:$0xff]
          %v681 = vld [vmem:[#allocation3 + $0x30] sm:$0xff]
          %v682 = vld [vmem:[#allocation3 + $0x38] sm:$0xff]
          %v683 = vld [vmem:[#allocation3 + $0x40] sm:$0xff]
          %v684 = vld [vmem:[#allocation3 + $0x48] sm:$0xff]
          %v685 = vld [vmem:[#allocation3 + $0x50] sm:$0xff]
          %v686 = vld [vmem:[#allocation3 + $0x58] sm:$0xff]
          %v687 = vld [vmem:[#allocation3 + $0x60] sm:$0xff]
          %v688 = vld [vmem:[#allocation3 + $0x68] sm:$0xff]
          %v689 = vld [vmem:[#allocation3 + $0x70] sm:$0xff]
          %v690 = vld [vmem:[#allocation3 + $0x78] sm:$0xff]
          %v691 = vld [vmem:[#allocation2] sm:$0xff]
          %v692 = vld [vmem:[#allocation2 + $0x8] sm:$0xff]
          %v693 = vld [vmem:[#allocation2 + $0x10] sm:$0xff]
          %v694 = vld [vmem:[#allocation2 + $0x18] sm:$0xff]
          %v695 = vld [vmem:[#allocation2 + $0x20] sm:$0xff]
          %v696 = vld [vmem:[#allocation2 + $0x28] sm:$0xff]
          %v697 = vld [vmem:[#allocation2 + $0x30] sm:$0xff]
          %v698 = vld [vmem:[#allocation2 + $0x38] sm:$0xff]
          %v699 = vld [vmem:[#allocation2 + $0x40] sm:$0xff]
          %v700 = vld [vmem:[#allocation2 + $0x48] sm:$0xff]
          %v701 = vld [vmem:[#allocation2 + $0x50] sm:$0xff]
          %v702 = vld [vmem:[#allocation2 + $0x58] sm:$0xff]
          %v703 = vld [vmem:[#allocation2 + $0x60] sm:$0xff]
          %v704 = vld [vmem:[#allocation2 + $0x68] sm:$0xff]
          %v705 = vld [vmem:[#allocation2 + $0x70] sm:$0xff]
          %v706 = vld [vmem:[#allocation2 + $0x78] sm:$0xff]
          %v707 = vld [vmem:[%s390] sm:$0xff]
          %v708 = vld [vmem:[%s390 + $0x8] sm:$0xff]
          %v709 = vld [vmem:[%s390 + $0x10] sm:$0xff]
          %v710 = vld [vmem:[%s390 + $0x18] sm:$0xff]
          %v712 = vsel %vm655, %v691, 0
          %v715 = vsel %vm655, %v692, 0
          %v718 = vsel %vm655, %v693, 0
          %v721 = vsel %vm655, %v694, 0
          %v724 = vsel %vm655, %v695, 0
          %v727 = vsel %vm655, %v696, 0
          %v730 = vsel %vm655, %v697, 0
          %v733 = vsel %vm655, %v698, 0
          %v736 = vsel %vm655, %v699, 0
          %v739 = vsel %vm655, %v700, 0
          %v742 = vsel %vm655, %v701, 0
          %v745 = vsel %vm655, %v702, 0
          %v748 = vsel %vm655, %v703, 0
          %v751 = vsel %vm655, %v704, 0
          %v754 = vsel %vm655, %v705, 0
          %v757 = vsel %vm655, %v706, 0
          %759 = vmatprep.subr.mxu0 0.0
          %760 = vmatpush1.msra.mxu0 0.0
          %761 = vmatprep.subr.mxu0 0.0
          %762 = vmatpush1.msra.mxu0 0.0
          %763 = vmatprep.subr.mxu0 0.0
          %764 = vmatpush1.msra.mxu0 0.0
          %765 = vmatprep.subr.mxu0 0.0
          %766 = vmatpush1.msra.mxu0 0.0
          %767 = vmatprep.subr.mxu0 0.0
          %768 = vmatpush1.msra.mxu0 0.0
          %769 = vmatprep.subr.mxu0 0.0
          %770 = vmatpush1.msra.mxu0 0.0
          %771 = vmatprep.subr.mxu0 0.0
          %772 = vmatpush1.msra.mxu0 0.0
          %773 = vmatprep.subr.mxu0 0.0
          %774 = vmatpush1.msra.mxu0 0.0
          %775 = vmatprep.subr.mxu0 0.0
          %776 = vmatpush1.msra.mxu0 0.0
          %777 = vmatprep.subr.mxu0 0.0
          %778 = vmatpush1.msra.mxu0 0.0
          %779 = vmatprep.subr.mxu0 0.0
          %780 = vmatpush1.msra.mxu0 0.0
          %781 = vmatprep.subr.mxu0 0.0
          %782 = vmatpush1.msra.mxu0 0.0
          %783 = vmatprep.subr.mxu0 0.0
          %784 = vmatpush1.msra.mxu0 %v710
          %785 = vmatprep.subr.mxu0 0.0
          %786 = vmatpush1.msra.mxu0 %v709
          %787 = vmatprep.subr.mxu0 0.0
          %788 = vmatpush1.msra.mxu0 %v708
          %789 = vmatprep.subr.mxu0 0.0
          %790 = vmatpush1.msra.mxu0 %v707
          %791 = vmatprep.subr.mxu0 0.0
          %792 = vmatpush2.msra.mxu0 0.0
          %793 = vmatprep.subr.mxu0 0.0
          %794 = vmatpush2.msra.mxu0 0.0
          %795 = vmatprep.subr.mxu0 0.0
          %796 = vmatpush2.msra.mxu0 0.0
          %797 = vmatprep.subr.mxu0 0.0
          %798 = vmatpush2.msra.mxu0 0.0
          %799 = vmatprep.subr.mxu0 0.0
          %800 = vmatpush2.msra.mxu0 0.0
          %801 = vmatprep.subr.mxu0 0.0
          %802 = vmatpush2.msra.mxu0 0.0
          %803 = vmatprep.subr.mxu0 0.0
          %804 = vmatpush2.msra.mxu0 0.0
          %805 = vmatprep.subr.mxu0 0.0
          %806 = vmatpush2.msra.mxu0 0.0
          %807 = vmatprep.subr.mxu0 0.0
          %808 = vmatpush2.msra.mxu0 0.0
          %809 = vmatprep.subr.mxu0 0.0
          %810 = vmatpush2.msra.mxu0 0.0
          %811 = vmatprep.subr.mxu0 0.0
          %812 = vmatpush2.msra.mxu0 0.0
          %813 = vmatprep.subr.mxu0 0.0
          %814 = vmatpush2.msra.mxu0 0.0
          %815 = vmatprep.subr.mxu0 0.0
          %816 = vmatpush2.msra.mxu0 0.0
          %817 = vmatprep.subr.mxu0 0.0
          %818 = vmatpush2.msra.mxu0 0.0
          %819 = vmatprep.subr.mxu0 0.0
          %820 = vmatpush2.msra.mxu0 0.0
          %821 = vmatprep.subr.mxu0 0.0
          %822 = vmatpush2.msra.mxu0 0.0
          %823 = vmatprep.mubr.f32.mxu0 0.0
          %824 = vmatmul.mubr.f32.gmra.mxu0 %v712
          %v825 = vpop.f32.mrf.mxu0
          %v826 = vadd.f32 0.0, %v825
          %v827 = vpop.f32.mrf.mxu0
          %828 = vmatprep.mubr.f32.mxu0 0.0
          %829 = vmatmul.mubr.f32.gmra.mxu0 %v715
          %v830 = vpop.f32.mrf.mxu0
          %v831 = vadd.f32 0.0, %v830
          %v832 = vpop.f32.mrf.mxu0
          %833 = vmatprep.mubr.f32.mxu0 0.0
          %834 = vmatmul.mubr.f32.gmra.mxu0 %v718
          %v835 = vpop.f32.mrf.mxu0
          %v836 = vadd.f32 0.0, %v835
          %v837 = vpop.f32.mrf.mxu0
          %838 = vmatprep.mubr.f32.mxu0 0.0
          %839 = vmatmul.mubr.f32.gmra.mxu0 %v721
          %v840 = vpop.f32.mrf.mxu0
          %v841 = vadd.f32 0.0, %v840
          %v842 = vpop.f32.mrf.mxu0
          %843 = vmatprep.mubr.f32.mxu0 0.0
          %844 = vmatmul.mubr.f32.gmra.mxu0 %v724
          %v845 = vpop.f32.mrf.mxu0
          %v846 = vadd.f32 0.0, %v845
          %v847 = vpop.f32.mrf.mxu0
          %848 = vmatprep.mubr.f32.mxu0 0.0
          %849 = vmatmul.mubr.f32.gmra.mxu0 %v727
          %v850 = vpop.f32.mrf.mxu0
          %v851 = vadd.f32 0.0, %v850
          %v852 = vpop.f32.mrf.mxu0
          %853 = vmatprep.mubr.f32.mxu0 0.0
          %854 = vmatmul.mubr.f32.gmra.mxu0 %v730
          %v855 = vpop.f32.mrf.mxu0
          %v856 = vadd.f32 0.0, %v855
          %v857 = vpop.f32.mrf.mxu0
          %858 = vmatprep.mubr.f32.mxu0 0.0
          %859 = vmatmul.mubr.f32.gmra.mxu0 %v733
          %v860 = vpop.f32.mrf.mxu0
          %v861 = vadd.f32 0.0, %v860
          %v862 = vpop.f32.mrf.mxu0
          %863 = vmatprep.mubr.f32.mxu0 0.0
          %864 = vmatmul.mubr.f32.gmra.mxu0 %v736
          %v865 = vpop.f32.mrf.mxu0
          %v866 = vadd.f32 0.0, %v865
          %v867 = vpop.f32.mrf.mxu0
          %868 = vmatprep.mubr.f32.mxu0 0.0
          %869 = vmatmul.mubr.f32.gmra.mxu0 %v739
          %v870 = vpop.f32.mrf.mxu0
          %v871 = vadd.f32 0.0, %v870
          %v872 = vpop.f32.mrf.mxu0
          %873 = vmatprep.mubr.f32.mxu0 0.0
          %874 = vmatmul.mubr.f32.gmra.mxu0 %v742
          %v875 = vpop.f32.mrf.mxu0
          %v876 = vadd.f32 0.0, %v875
          %v877 = vpop.f32.mrf.mxu0
          %878 = vmatprep.mubr.f32.mxu0 0.0
          %879 = vmatmul.mubr.f32.gmra.mxu0 %v745
          %v880 = vpop.f32.mrf.mxu0
          %v881 = vadd.f32 0.0, %v880
          %v882 = vpop.f32.mrf.mxu0
          %883 = vmatprep.mubr.f32.mxu0 0.0
          %884 = vmatmul.mubr.f32.gmra.mxu0 %v748
          %v885 = vpop.f32.mrf.mxu0
          %v886 = vadd.f32 0.0, %v885
          %v887 = vpop.f32.mrf.mxu0
          %888 = vmatprep.mubr.f32.mxu0 0.0
          %889 = vmatmul.mubr.f32.gmra.mxu0 %v751
          %v890 = vpop.f32.mrf.mxu0
          %v891 = vadd.f32 0.0, %v890
          %v892 = vpop.f32.mrf.mxu0
          %893 = vmatprep.mubr.f32.mxu0 0.0
          %894 = vmatmul.mubr.f32.gmra.mxu0 %v754
          %v895 = vpop.f32.mrf.mxu0
          %v896 = vadd.f32 0.0, %v895
          %v897 = vpop.f32.mrf.mxu0
          %898 = vmatprep.mubr.f32.mxu0 0.0
          %899 = vmatmul.mubr.f32.gmra.mxu0 %v757
          %v900 = vpop.f32.mrf.mxu0
          %v901 = vadd.f32 0.0, %v900
          %v902 = vpop.f32.mrf.mxu0
          %903 = vdwg.mxu0
          %v904 = vadd.f32 %v675, %v826
          %v905 = vadd.f32 %v676, %v831
          %v906 = vadd.f32 %v677, %v836
          %v907 = vadd.f32 %v678, %v841
          %v908 = vadd.f32 %v679, %v846
          %v909 = vadd.f32 %v680, %v851
          %v910 = vadd.f32 %v681, %v856
          %v911 = vadd.f32 %v682, %v861
          %v912 = vadd.f32 %v683, %v866
          %v913 = vadd.f32 %v684, %v871
          %v914 = vadd.f32 %v685, %v876
          %v915 = vadd.f32 %v686, %v881
          %v916 = vadd.f32 %v687, %v886
          %v917 = vadd.f32 %v688, %v891
          %v918 = vadd.f32 %v689, %v896
          %v919 = vadd.f32 %v690, %v901
          %920 = vst [vmem:[#allocation3] sm:$0xff] %v904
          %921 = vst [vmem:[#allocation3 + $0x8] sm:$0xff] %v905
          %922 = vst [vmem:[#allocation3 + $0x10] sm:$0xff] %v906
          %923 = vst [vmem:[#allocation3 + $0x18] sm:$0xff] %v907
          %924 = vst [vmem:[#allocation3 + $0x20] sm:$0xff] %v908
          %925 = vst [vmem:[#allocation3 + $0x28] sm:$0xff] %v909
          %926 = vst [vmem:[#allocation3 + $0x30] sm:$0xff] %v910
          %927 = vst [vmem:[#allocation3 + $0x38] sm:$0xff] %v911
          %928 = vst [vmem:[#allocation3 + $0x40] sm:$0xff] %v912
          %929 = vst [vmem:[#allocation3 + $0x48] sm:$0xff] %v913
          %930 = vst [vmem:[#allocation3 + $0x50] sm:$0xff] %v914
          %931 = vst [vmem:[#allocation3 + $0x58] sm:$0xff] %v915
          %932 = vst [vmem:[#allocation3 + $0x60] sm:$0xff] %v916
          %933 = vst [vmem:[#allocation3 + $0x68] sm:$0xff] %v917
          %934 = vst [vmem:[#allocation3 + $0x70] sm:$0xff] %v918
          %935 = vst [vmem:[#allocation3 + $0x78] sm:$0xff] %v919
        $region64: #{tpu_custom_call.1} parent=47 // pred_fallthru
          _
        %p936 = scmp.eq.s32.totalorder %s28, 3
        %p937 = pnand %p936, %p405
        %p938 = pneg %p937
        // Predicated region
        $region65: #{tpu_custom_call.1} parent=47 // pred_check
          _
        $region66: #{tpu_custom_call.1} parent=47 // pred_check_branch
          %940 = sbr.rel (%p937) target = $region68
        $region67: #{tpu_custom_call.1} parent=47 // pred_region
          %v941 = vld [vmem:[%s395] sm:$0xff]
          %v942 = vld [vmem:[%s395 + $0x8] sm:$0xff]
          %v943 = vld [vmem:[%s395 + $0x10] sm:$0xff]
          %v944 = vld [vmem:[%s395 + $0x18] sm:$0xff]
          %v945 = vld [vmem:[%s395 + $0x20] sm:$0xff]
          %v946 = vld [vmem:[%s395 + $0x28] sm:$0xff]
          %v947 = vld [vmem:[%s395 + $0x30] sm:$0xff]
          %v948 = vld [vmem:[%s395 + $0x38] sm:$0xff]
          %v949 = vld [vmem:[%s395 + $0x40] sm:$0xff]
          %v950 = vld [vmem:[%s395 + $0x48] sm:$0xff]
          %v951 = vld [vmem:[%s395 + $0x50] sm:$0xff]
          %v952 = vld [vmem:[%s395 + $0x58] sm:$0xff]
          %v953 = vld [vmem:[%s395 + $0x60] sm:$0xff]
          %v954 = vld [vmem:[%s395 + $0x68] sm:$0xff]
          %v955 = vld [vmem:[%s395 + $0x70] sm:$0xff]
          %v956 = vld [vmem:[%s395 + $0x78] sm:$0xff]
          %v957 = vld [vmem:[%s4] sm:$0xff]
          %v958 = vld [vmem:[%s4 + $0x8] sm:$0xff]
          %v959 = vld [vmem:[%s4 + $0x10] sm:$0xff]
          %v960 = vld [vmem:[%s4 + $0x18] sm:$0xff]
          %v962 = vsel %vm655, %v941, 0
          %v965 = vsel %vm655, %v942, 0
          %v968 = vsel %vm655, %v943, 0
          %v971 = vsel %vm655, %v944, 0
          %v974 = vsel %vm655, %v945, 0
          %v977 = vsel %vm655, %v946, 0
          %v980 = vsel %vm655, %v947, 0
          %v983 = vsel %vm655, %v948, 0
          %v986 = vsel %vm655, %v949, 0
          %v989 = vsel %vm655, %v950, 0
          %v992 = vsel %vm655, %v951, 0
          %v995 = vsel %vm655, %v952, 0
          %v998 = vsel %vm655, %v953, 0
          %v1001 = vsel %vm655, %v954, 0
          %v1004 = vsel %vm655, %v955, 0
          %v1007 = vsel %vm655, %v956, 0
          %1009 = vmatprep.subr.mxu0 0.0
          %1010 = vmatpush1.msra.mxu0 0.0
          %1011 = vmatprep.subr.mxu0 0.0
          %1012 = vmatpush1.msra.mxu0 0.0
          %1013 = vmatprep.subr.mxu0 0.0
          %1014 = vmatpush1.msra.mxu0 0.0
          %1015 = vmatprep.subr.mxu0 0.0
          %1016 = vmatpush1.msra.mxu0 0.0
          %1017 = vmatprep.subr.mxu0 0.0
          %1018 = vmatpush1.msra.mxu0 0.0
          %1019 = vmatprep.subr.mxu0 0.0
          %1020 = vmatpush1.msra.mxu0 0.0
          %1021 = vmatprep.subr.mxu0 0.0
          %1022 = vmatpush1.msra.mxu0 0.0
          %1023 = vmatprep.subr.mxu0 0.0
          %1024 = vmatpush1.msra.mxu0 0.0
          %1025 = vmatprep.subr.mxu0 0.0
          %1026 = vmatpush1.msra.mxu0 0.0
          %1027 = vmatprep.subr.mxu0 0.0
          %1028 = vmatpush1.msra.mxu0 0.0
          %1029 = vmatprep.subr.mxu0 0.0
          %1030 = vmatpush1.msra.mxu0 0.0
          %1031 = vmatprep.subr.mxu0 0.0
          %1032 = vmatpush1.msra.mxu0 0.0
          %1033 = vmatprep.subr.mxu0 0.0
          %1034 = vmatpush1.msra.mxu0 %v960
          %1035 = vmatprep.subr.mxu0 0.0
          %1036 = vmatpush1.msra.mxu0 %v959
          %1037 = vmatprep.subr.mxu0 0.0
          %1038 = vmatpush1.msra.mxu0 %v958
          %1039 = vmatprep.subr.mxu0 0.0
          %1040 = vmatpush1.msra.mxu0 %v957
          %1041 = vmatprep.subr.mxu0 0.0
          %1042 = vmatpush2.msra.mxu0 0.0
          %1043 = vmatprep.subr.mxu0 0.0
          %1044 = vmatpush2.msra.mxu0 0.0
          %1045 = vmatprep.subr.mxu0 0.0
          %1046 = vmatpush2.msra.mxu0 0.0
          %1047 = vmatprep.subr.mxu0 0.0
          %1048 = vmatpush2.msra.mxu0 0.0
          %1049 = vmatprep.subr.mxu0 0.0
          %1050 = vmatpush2.msra.mxu0 0.0
          %1051 = vmatprep.subr.mxu0 0.0
          %1052 = vmatpush2.msra.mxu0 0.0
          %1053 = vmatprep.subr.mxu0 0.0
          %1054 = vmatpush2.msra.mxu0 0.0
          %1055 = vmatprep.subr.mxu0 0.0
          %1056 = vmatpush2.msra.mxu0 0.0
          %1057 = vmatprep.subr.mxu0 0.0
          %1058 = vmatpush2.msra.mxu0 0.0
          %1059 = vmatprep.subr.mxu0 0.0
          %1060 = vmatpush2.msra.mxu0 0.0
          %1061 = vmatprep.subr.mxu0 0.0
          %1062 = vmatpush2.msra.mxu0 0.0
          %1063 = vmatprep.subr.mxu0 0.0
          %1064 = vmatpush2.msra.mxu0 0.0
          %1065 = vmatprep.subr.mxu0 0.0
          %1066 = vmatpush2.msra.mxu0 0.0
          %1067 = vmatprep.subr.mxu0 0.0
          %1068 = vmatpush2.msra.mxu0 0.0
          %1069 = vmatprep.subr.mxu0 0.0
          %1070 = vmatpush2.msra.mxu0 0.0
          %1071 = vmatprep.subr.mxu0 0.0
          %1072 = vmatpush2.msra.mxu0 0.0
          %1073 = vmatprep.mubr.f32.mxu0 0.0
          %1074 = vmatmul.mubr.f32.gmra.mxu0 %v962
          %v1075 = vpop.f32.mrf.mxu0
          %v1076 = vadd.f32 0.0, %v1075
          %v1077 = vpop.f32.mrf.mxu0
          %1078 = vmatprep.mubr.f32.mxu0 0.0
          %1079 = vmatmul.mubr.f32.gmra.mxu0 %v965
          %v1080 = vpop.f32.mrf.mxu0
          %v1081 = vadd.f32 0.0, %v1080
          %v1082 = vpop.f32.mrf.mxu0
          %1083 = vmatprep.mubr.f32.mxu0 0.0
          %1084 = vmatmul.mubr.f32.gmra.mxu0 %v968
          %v1085 = vpop.f32.mrf.mxu0
          %v1086 = vadd.f32 0.0, %v1085
          %v1087 = vpop.f32.mrf.mxu0
          %1088 = vmatprep.mubr.f32.mxu0 0.0
          %1089 = vmatmul.mubr.f32.gmra.mxu0 %v971
          %v1090 = vpop.f32.mrf.mxu0
          %v1091 = vadd.f32 0.0, %v1090
          %v1092 = vpop.f32.mrf.mxu0
          %1093 = vmatprep.mubr.f32.mxu0 0.0
          %1094 = vmatmul.mubr.f32.gmra.mxu0 %v974
          %v1095 = vpop.f32.mrf.mxu0
          %v1096 = vadd.f32 0.0, %v1095
          %v1097 = vpop.f32.mrf.mxu0
          %1098 = vmatprep.mubr.f32.mxu0 0.0
          %1099 = vmatmul.mubr.f32.gmra.mxu0 %v977
          %v1100 = vpop.f32.mrf.mxu0
          %v1101 = vadd.f32 0.0, %v1100
          %v1102 = vpop.f32.mrf.mxu0
          %1103 = vmatprep.mubr.f32.mxu0 0.0
          %1104 = vmatmul.mubr.f32.gmra.mxu0 %v980
          %v1105 = vpop.f32.mrf.mxu0
          %v1106 = vadd.f32 0.0, %v1105
          %v1107 = vpop.f32.mrf.mxu0
          %1108 = vmatprep.mubr.f32.mxu0 0.0
          %1109 = vmatmul.mubr.f32.gmra.mxu0 %v983
          %v1110 = vpop.f32.mrf.mxu0
          %v1111 = vadd.f32 0.0, %v1110
          %v1112 = vpop.f32.mrf.mxu0
          %1113 = vmatprep.mubr.f32.mxu0 0.0
          %1114 = vmatmul.mubr.f32.gmra.mxu0 %v986
          %v1115 = vpop.f32.mrf.mxu0
          %v1116 = vadd.f32 0.0, %v1115
          %v1117 = vpop.f32.mrf.mxu0
          %1118 = vmatprep.mubr.f32.mxu0 0.0
          %1119 = vmatmul.mubr.f32.gmra.mxu0 %v989
          %v1120 = vpop.f32.mrf.mxu0
          %v1121 = vadd.f32 0.0, %v1120
          %v1122 = vpop.f32.mrf.mxu0
          %1123 = vmatprep.mubr.f32.mxu0 0.0
          %1124 = vmatmul.mubr.f32.gmra.mxu0 %v992
          %v1125 = vpop.f32.mrf.mxu0
          %v1126 = vadd.f32 0.0, %v1125
          %v1127 = vpop.f32.mrf.mxu0
          %1128 = vmatprep.mubr.f32.mxu0 0.0
          %1129 = vmatmul.mubr.f32.gmra.mxu0 %v995
          %v1130 = vpop.f32.mrf.mxu0
          %v1131 = vadd.f32 0.0, %v1130
          %v1132 = vpop.f32.mrf.mxu0
          %1133 = vmatprep.mubr.f32.mxu0 0.0
          %1134 = vmatmul.mubr.f32.gmra.mxu0 %v998
          %v1135 = vpop.f32.mrf.mxu0
          %v1136 = vadd.f32 0.0, %v1135
          %v1137 = vpop.f32.mrf.mxu0
          %1138 = vmatprep.mubr.f32.mxu0 0.0
          %1139 = vmatmul.mubr.f32.gmra.mxu0 %v1001
          %v1140 = vpop.f32.mrf.mxu0
          %v1141 = vadd.f32 0.0, %v1140
          %v1142 = vpop.f32.mrf.mxu0
          %1143 = vmatprep.mubr.f32.mxu0 0.0
          %1144 = vmatmul.mubr.f32.gmra.mxu0 %v1004
          %v1145 = vpop.f32.mrf.mxu0
          %v1146 = vadd.f32 0.0, %v1145
          %v1147 = vpop.f32.mrf.mxu0
          %1148 = vmatprep.mubr.f32.mxu0 0.0
          %1149 = vmatmul.mubr.f32.gmra.mxu0 %v1007
          %v1150 = vpop.f32.mrf.mxu0
          %v1151 = vadd.f32 0.0, %v1150
          %v1152 = vpop.f32.mrf.mxu0
          %1153 = vdwg.mxu0
          %v1154 = vld [vmem:[#allocation3] sm:$0xff]
          %v1155 = vld [vmem:[#allocation3 + $0x8] sm:$0xff]
          %v1156 = vld [vmem:[#allocation3 + $0x10] sm:$0xff]
          %v1157 = vld [vmem:[#allocation3 + $0x18] sm:$0xff]
          %v1158 = vld [vmem:[#allocation3 + $0x20] sm:$0xff]
          %v1159 = vld [vmem:[#allocation3 + $0x28] sm:$0xff]
          %v1160 = vld [vmem:[#allocation3 + $0x30] sm:$0xff]
          %v1161 = vld [vmem:[#allocation3 + $0x38] sm:$0xff]
          %v1162 = vld [vmem:[#allocation3 + $0x40] sm:$0xff]
          %v1163 = vld [vmem:[#allocation3 + $0x48] sm:$0xff]
          %v1164 = vld [vmem:[#allocation3 + $0x50] sm:$0xff]
          %v1165 = vld [vmem:[#allocation3 + $0x58] sm:$0xff]
          %v1166 = vld [vmem:[#allocation3 + $0x60] sm:$0xff]
          %v1167 = vld [vmem:[#allocation3 + $0x68] sm:$0xff]
          %v1168 = vld [vmem:[#allocation3 + $0x70] sm:$0xff]
          %v1169 = vld [vmem:[#allocation3 + $0x78] sm:$0xff]
          %v1170 = vld [vmem:[%s401] sm:$0xff]
          %v1171 = vld [vmem:[%s401 + $0x8] sm:$0xff]
          %v1172 = vld [vmem:[%s401 + $0x10] sm:$0xff]
          %v1173 = vld [vmem:[%s401 + $0x18] sm:$0xff]
          %v1174 = vld [vmem:[%s401 + $0x20] sm:$0xff]
          %v1175 = vld [vmem:[%s401 + $0x28] sm:$0xff]
          %v1176 = vld [vmem:[%s401 + $0x30] sm:$0xff]
          %v1177 = vld [vmem:[%s401 + $0x38] sm:$0xff]
          %v1178 = vld [vmem:[%s401 + $0x40] sm:$0xff]
          %v1179 = vld [vmem:[%s401 + $0x48] sm:$0xff]
          %v1180 = vld [vmem:[%s401 + $0x50] sm:$0xff]
          %v1181 = vld [vmem:[%s401 + $0x58] sm:$0xff]
          %v1182 = vld [vmem:[%s401 + $0x60] sm:$0xff]
          %v1183 = vld [vmem:[%s401 + $0x68] sm:$0xff]
          %v1184 = vld [vmem:[%s401 + $0x70] sm:$0xff]
          %v1185 = vld [vmem:[%s401 + $0x78] sm:$0xff]
          %1187 = vset.pattern.permute.xlu0 0
          %1188 = vperm.xlu0 %1187, %v1170
          %v1189 = vpop.permute.xlu0 %1188
          %1192 = vset.pattern.permute.xlu0 0
          %1193 = vperm.xlu0 %1192, %v1171
          %v1194 = vpop.permute.xlu0 %1193
          %1197 = vset.pattern.permute.xlu0 0
          %1198 = vperm.xlu0 %1197, %v1172
          %v1199 = vpop.permute.xlu0 %1198
          %1202 = vset.pattern.permute.xlu0 0
          %1203 = vperm.xlu0 %1202, %v1173
          %v1204 = vpop.permute.xlu0 %1203
          %1207 = vset.pattern.permute.xlu0 0
          %1208 = vperm.xlu0 %1207, %v1174
          %v1209 = vpop.permute.xlu0 %1208
          %1212 = vset.pattern.permute.xlu0 0
          %1213 = vperm.xlu0 %1212, %v1175
          %v1214 = vpop.permute.xlu0 %1213
          %1217 = vset.pattern.permute.xlu0 0
          %1218 = vperm.xlu0 %1217, %v1176
          %v1219 = vpop.permute.xlu0 %1218
          %1222 = vset.pattern.permute.xlu0 0
          %1223 = vperm.xlu0 %1222, %v1177
          %v1224 = vpop.permute.xlu0 %1223
          %1227 = vset.pattern.permute.xlu0 0
          %1228 = vperm.xlu0 %1227, %v1178
          %v1229 = vpop.permute.xlu0 %1228
          %1232 = vset.pattern.permute.xlu0 0
          %1233 = vperm.xlu0 %1232, %v1179
          %v1234 = vpop.permute.xlu0 %1233
          %1237 = vset.pattern.permute.xlu0 0
          %1238 = vperm.xlu0 %1237, %v1180
          %v1239 = vpop.permute.xlu0 %1238
          %1242 = vset.pattern.permute.xlu0 0
          %1243 = vperm.xlu0 %1242, %v1181
          %v1244 = vpop.permute.xlu0 %1243
          %1247 = vset.pattern.permute.xlu0 0
          %1248 = vperm.xlu0 %1247, %v1182
          %v1249 = vpop.permute.xlu0 %1248
          %1252 = vset.pattern.permute.xlu0 0
          %1253 = vperm.xlu0 %1252, %v1183
          %v1254 = vpop.permute.xlu0 %1253
          %1257 = vset.pattern.permute.xlu0 0
          %1258 = vperm.xlu0 %1257, %v1184
          %v1259 = vpop.permute.xlu0 %1258
          %1262 = vset.pattern.permute.xlu0 0
          %1263 = vperm.xlu0 %1262, %v1185
          %v1264 = vpop.permute.xlu0 %1263
          %v1266 = vmul.f32 %v1154, %v1189
          %v1267 = vmul.f32 %v1155, %v1194
          %v1268 = vmul.f32 %v1156, %v1199
          %v1269 = vmul.f32 %v1157, %v1204
          %v1270 = vmul.f32 %v1158, %v1209
          %v1271 = vmul.f32 %v1159, %v1214
          %v1272 = vmul.f32 %v1160, %v1219
          %v1273 = vmul.f32 %v1161, %v1224
          %v1274 = vmul.f32 %v1162, %v1229
          %v1275 = vmul.f32 %v1163, %v1234
          %v1276 = vmul.f32 %v1164, %v1239
          %v1277 = vmul.f32 %v1165, %v1244
          %v1278 = vmul.f32 %v1166, %v1249
          %v1279 = vmul.f32 %v1167, %v1254
          %v1280 = vmul.f32 %v1168, %v1259
          %v1281 = vmul.f32 %v1169, %v1264
          %v1282 = vadd.f32 %v1266, %v1076
          %v1283 = vadd.f32 %v1267, %v1081
          %v1284 = vadd.f32 %v1268, %v1086
          %v1285 = vadd.f32 %v1269, %v1091
          %v1286 = vadd.f32 %v1270, %v1096
          %v1287 = vadd.f32 %v1271, %v1101
          %v1288 = vadd.f32 %v1272, %v1106
          %v1289 = vadd.f32 %v1273, %v1111
          %v1290 = vadd.f32 %v1274, %v1116
          %v1291 = vadd.f32 %v1275, %v1121
          %v1292 = vadd.f32 %v1276, %v1126
          %v1293 = vadd.f32 %v1277, %v1131
          %v1294 = vadd.f32 %v1278, %v1136
          %v1295 = vadd.f32 %v1279, %v1141
          %v1296 = vadd.f32 %v1280, %v1146
          %v1297 = vadd.f32 %v1281, %v1151
          %v1298 = vld [vmem:[%s6] sm:$0x1]
          %v1300 = vlaneseq
          %v1301 = vshrl.u32 %v1300, 7
          %v1302 = vsub.s32 0, %v1301
          %v1303 = vrot.slane %v1298, %v1302
          %v1305 = vadd.f32 %v1282, %v1303
          %v1306 = vadd.f32 %v1283, %v1303
          %v1307 = vadd.f32 %v1284, %v1303
          %v1308 = vadd.f32 %v1285, %v1303
          %v1309 = vadd.f32 %v1286, %v1303
          %v1310 = vadd.f32 %v1287, %v1303
          %v1311 = vadd.f32 %v1288, %v1303
          %v1312 = vadd.f32 %v1289, %v1303
          %v1313 = vadd.f32 %v1290, %v1303
          %v1314 = vadd.f32 %v1291, %v1303
          %v1315 = vadd.f32 %v1292, %v1303
          %v1316 = vadd.f32 %v1293, %v1303
          %v1317 = vadd.f32 %v1294, %v1303
          %v1318 = vadd.f32 %v1295, %v1303
          %v1319 = vadd.f32 %v1296, %v1303
          %v1320 = vadd.f32 %v1297, %v1303
          %v1321 = vmax.f32 %v1305, 0.0
          %v1322 = vmax.f32 %v1306, 0.0
          %v1323 = vmax.f32 %v1307, 0.0
          %v1324 = vmax.f32 %v1308, 0.0
          %v1325 = vmax.f32 %v1309, 0.0
          %v1326 = vmax.f32 %v1310, 0.0
          %v1327 = vmax.f32 %v1311, 0.0
          %v1328 = vmax.f32 %v1312, 0.0
          %v1329 = vmax.f32 %v1313, 0.0
          %v1330 = vmax.f32 %v1314, 0.0
          %v1331 = vmax.f32 %v1315, 0.0
          %v1332 = vmax.f32 %v1316, 0.0
          %v1333 = vmax.f32 %v1317, 0.0
          %v1334 = vmax.f32 %v1318, 0.0
          %v1335 = vmax.f32 %v1319, 0.0
          %v1336 = vmax.f32 %v1320, 0.0
          %1337 = vst [vmem:[#allocation7] sm:$0xff] %v1321
          %1338 = vst [vmem:[#allocation7 + $0x8] sm:$0xff] %v1322
          %1339 = vst [vmem:[#allocation7 + $0x10] sm:$0xff] %v1323
          %1340 = vst [vmem:[#allocation7 + $0x18] sm:$0xff] %v1324
          %1341 = vst [vmem:[#allocation7 + $0x20] sm:$0xff] %v1325
          %1342 = vst [vmem:[#allocation7 + $0x28] sm:$0xff] %v1326
          %1343 = vst [vmem:[#allocation7 + $0x30] sm:$0xff] %v1327
          %1344 = vst [vmem:[#allocation7 + $0x38] sm:$0xff] %v1328
          %1345 = vst [vmem:[#allocation7 + $0x40] sm:$0xff] %v1329
          %1346 = vst [vmem:[#allocation7 + $0x48] sm:$0xff] %v1330
          %1347 = vst [vmem:[#allocation7 + $0x50] sm:$0xff] %v1331
          %1348 = vst [vmem:[#allocation7 + $0x58] sm:$0xff] %v1332
          %1349 = vst [vmem:[#allocation7 + $0x60] sm:$0xff] %v1333
          %1350 = vst [vmem:[#allocation7 + $0x68] sm:$0xff] %v1334
          %1351 = vst [vmem:[#allocation7 + $0x70] sm:$0xff] %v1335
          %1352 = vst [vmem:[#allocation7 + $0x78] sm:$0xff] %v1336
        $region68: #{tpu_custom_call.1} parent=47 // pred_fallthru
          _
        // Predicated region
        $region69: #{tpu_custom_call.1} parent=47 // pred_check
          %p1353 = pneg %p235
        $region70: #{tpu_custom_call.1} parent=47 // pred_check_branch
          %1355 = sbr.rel (%p1353) target = $region72
        $region71: #{tpu_custom_call.1} parent=47 // pred_region
          %s1356 = smul.u32 16, %s27
          %s1358 = ssub.s32 2048, 2048
          %1359 = vsyncadd [#allocation6], %s1358
          %s1360 = smul.addr %s1356, 128
          %s1361 = scalar_lea.hbm %s7, %s1360
          %s1362 = sshll.u32 [#allocation7], 4
          %s1363 = int_to_ptr.vmem [resolvable:$true] %s1362
          %1368 = dma.vmem_to_hbm [thread:$0]  %s1363, 2048, %s1361, [#allocation6], 128, 128, 8
        $region72: #{tpu_custom_call.1} parent=47 // pred_fallthru
          _
        // Predicated region
        $region73: #{tpu_custom_call.1} parent=47 // pred_check
          %p1369 = pneg %p235
        $region74: #{tpu_custom_call.1} parent=47 // pred_check_branch
          %1371 = sbr.rel (%p1369) target = $region76
        $region75: #{tpu_custom_call.1} parent=47 // pred_region
          %1372 = dma.done [#allocation6], 2048
        $region76: #{tpu_custom_call.1} parent=47 // pred_fallthru
          _
      $region48: #{tpu_custom_call.1} parent=5 // pred_fallthru
        _
      %p1373 = scmp.le.s32.totalorder 2, %s17
      // Predicated region
      $region77: #{tpu_custom_call.1} parent=5 // pred_check
        %p1374 = pneg %p1373
      $region78: #{tpu_custom_call.1} parent=5 // pred_check_branch
        %1376 = sbr.rel (%p1374) target = $region80
      $region79: #{tpu_custom_call.1} parent=5 // pred_region
        %s1377 = ssub.s32 %s17, 2
      $region80: #{tpu_custom_call.1} parent=5 // pred_fallthru
        _
    $region6: #{tpu_custom_call.1} parent=1 // loop_footer
      %s21 = sadd.s32 1, %s17
    $region7: #{tpu_custom_call.1} parent=1 // loop_footer_branch
      %16 = sbr.rel target = $region3
    $region8: #{tpu_custom_call.1} parent=1 // loop_exit
      _
    %1378 = vsyncpa [#allocation5], 1
    %s1379 = scalar_lea.sflag [#allocation5], 1
    %1380 = vsyncpa %s1379, 1
    %1381 = vsyncpa [#allocation6], 1
    %s1382 = scalar_lea.sflag [#allocation6], 1
    %1383 = vsyncpa %s1382, 1

</llo_original>
